<compile_context>
chip_gen: v7x
topology: tpu7x:2x2x1
jax: 0.10.0
libtpu: 0.0.40
codegen_flags: <defaults>
</compile_context>

<pallas_src>
import jax
import jax.numpy as jnp
from jax.experimental import pallas as pl
from jax.experimental.pallas import tpu as pltpu

_SQRT2 = 1.4142135623730951
# Abramowitz-Stegun 7.1.26 erf constants; the GELU 1/sqrt(2) is folded into p.
_P_S = 0.3275911 / _SQRT2
_A1, _A2, _A3, _A4, _A5 = (0.254829592, -0.284496736, 1.421413741,
                           -1.453152027, 1.061405429)


def _gelu_exact(x):
    """torch.nn.GELU() default (approximate='none'): 0.5*x*(1+erf(x/sqrt2)).

    Rewritten as 0.5*(x + |x| - |x|*E) with E = poly(t)*exp(-x^2/2) and
    t ~ 1/(1 + (p/sqrt2)*|x|): removes the sign/where select and the separate
    1/sqrt(2) scaling (fewer VALU ops); exp + reciprocal run on the EUP slot.
    Max abs err vs exact erf ~1.5e-7.
    """
    ax = jnp.abs(x)
    den = 1.0 + _P_S * ax
    r = pl.reciprocal(den, approx=True)   # EUP slot
    t = r * (2.0 - den * r)               # one Newton step -> ~f32-exact 1/den
    poly = ((((_A5 * t + _A4) * t + _A3) * t + _A2) * t + _A1) * t
    e = poly * jnp.exp(-0.5 * x * x)      # EUP slot
    return 0.5 * (x + ax - ax * e)


def _conv3_strided(src_ref, w_ref, t_out, stride):
    """sum_k src[k::stride][:t_out] @ w[k], accumulated in an f32 VALUE."""
    acc = jnp.dot(src_ref[pl.ds(0, t_out, stride=stride), :], w_ref[0],
                  preferred_element_type=jnp.float32)
    for k in (1, 2):  # static unroll over the remaining taps
        acc = acc + jnp.dot(src_ref[pl.ds(k, t_out, stride=stride), :],
                            w_ref[k], preferred_element_type=jnp.float32)
    return acc


def _fused_subsample6_kernel(x_ref, w1_ref, b1_ref, w2_ref, b2_ref,
                             w3_ref, b3_ref, o_ref, h1_ref, h2_ref):
    # x_ref : (T, idim_p)      one batch element, channels padded to 128*n
    # w1_ref: (3*idim_p, cp)   im2col-folded layer-1 weights
    # w2/w3 : (3, cp, cp)      per-tap weights
    # bK_ref: (1, cp) f32
    # o_ref : (T3, cp)
    # h1/h2 : (T1, cp)/(T2, cp) VMEM scratch in the compute dtype
    t1, t2, t3 = h1_ref.shape[0], h2_ref.shape[0], o_ref.shape[0]
    cdt = h1_ref.dtype

    # Layer 1: Conv1d(idim -> odim, k=3, s=1) + GELU, K-folded im2col.
    # Each shifted slice is 128*n lanes wide, so the concat is a vreg-aligned
    # placement (no cross-lane shuffles); one matmul with K = 3*idim_p.
    lhs = jnp.concatenate([x_ref[pl.ds(k, t1), :] for k in range(3)], axis=1)
    acc1 = jnp.dot(lhs, w1_ref[...], preferred_element_type=jnp.float32)
    h1_ref[...] = _gelu_exact(acc1 + b1_ref[...]).astype(cdt)

    # Layer 2: Conv1d(odim -> odim, k=3, s=2) + GELU.  Stride folded into the
    # sublane-strided tap reads; K = cp is already full MXU cadence, so three
    # matmuls accumulate in a value and the scratch is written exactly once.
    acc2 = _conv3_strided(h1_ref, w2_ref, t2, 2)
    h2_ref[...] = _gelu_exact(acc2 + b2_ref[...]).astype(cdt)

    # Layer 3: Conv1d(odim -> odim, k=3, s=3) + GELU -> HBM output.
    acc3 = _conv3_strided(h2_ref, w3_ref, t3, 3)
    o_ref[...] = _gelu_exact(acc3 + b3_ref[...]).astype(o_ref.dtype)


def _round_up(n, m):
    return ((n + m - 1) // m) * m


def _vmem_limit_bytes():
    """~3/4 of physical VMEM (v7x ~48 MiB, v5e/v6e ~96 MiB); safe fallback."""
    try:
        cap = getattr(pltpu.get_tpu_info(), "vmem_capacity_bytes", None)
    except Exception:
        cap = None
    if not cap:
        return 64 * 1024 * 1024
    return int(min(cap * 3 // 4, 112 * 1024 * 1024))


@jax.jit
def aslp_conv1d_subsampling6(x, w1, b1, w2, b2, w3, b3):
    """x: (B, T, idim) -> (B, T_out, odim).

    Weights are stored as (3, Cin, Cout), i.e. w[k] == W_torch[:, :, k].T;
    biases are (1, Cout).  Compute dtype follows x.dtype (pass bf16 inputs /
    weights for the bf16 MXU + bf16-scratch path); accumulation and GELU stay
    in f32.
    """
    B, T, idim = x.shape
    odim = w1.shape[2]
    if T < 9:
        raise ValueError(f"T={T} too short for Conv1dSubsampling6 (need >= 9)")

    # Output time lengths of the three chained valid convs (strides 1, 2, 3).
    t1 = T - 2
    t2 = (t1 - 3) // 2 + 1
    t3 = (t2 - 3) // 3 + 1

    cp = _round_up(odim, 128)   # lane-dense output channels
    ip = _round_up(idim, 128)   # lane-dense input channels (im2col alignment)
    pad_o = cp - odim
    cdt = x.dtype

    xp = x if ip == idim else jnp.pad(x, ((0, 0), (0, 0), (0, ip - idim)))

    # Layer-1 weights folded for im2col: (3, ip, cp) -> (3*ip, cp) row-major,
    # so row k*ip + i multiplies lhs column k*ip + i == x[t+k, i].
    w1p = (jnp.pad(w1, ((0, 0), (0, ip - idim), (0, pad_o)))
           .astype(cdt).reshape(3 * ip, cp))
    w2p = jnp.pad(w2, ((0, 0), (0, pad_o), (0, pad_o))).astype(cdt)
    w3p = jnp.pad(w3, ((0, 0), (0, pad_o), (0, pad_o))).astype(cdt)
    b1p = jnp.pad(b1, ((0, 0), (0, pad_o))).astype(jnp.float32)
    b2p = jnp.pad(b2, ((0, 0), (0, pad_o))).astype(jnp.float32)
    b3p = jnp.pad(b3, ((0, 0), (0, pad_o))).astype(jnp.float32)

    y_padded = pl.pallas_call(
        _fused_subsample6_kernel,
        out_shape=jax.ShapeDtypeStruct((B, t3, cp), x.dtype),
        grid=(B,),
        in_specs=[
            pl.BlockSpec((None, T, ip), lambda b: (b, 0, 0)),
            pl.BlockSpec((3 * ip, cp), lambda b: (0, 0)),      # constant maps:
            pl.BlockSpec((1, cp), lambda b: (0, 0)),            # weights are
            pl.BlockSpec((3, cp, cp), lambda b: (0, 0, 0)),     # fetched once
            pl.BlockSpec((1, cp), lambda b: (0, 0)),            # and reused
            pl.BlockSpec((3, cp, cp), lambda b: (0, 0, 0)),     # across the
            pl.BlockSpec((1, cp), lambda b: (0, 0)),            # batch grid
        ],
        out_specs=pl.BlockSpec((None, t3, cp), lambda b: (b, 0, 0)),
        scratch_shapes=[
            pltpu.VMEM((t1, cp), cdt),   # layer-1 activations (VMEM only)
            pltpu.VMEM((t2, cp), cdt),   # layer-2 activations (VMEM only)
        ],
        compiler_params=pltpu.CompilerParams(
            dimension_semantics=("parallel",),       # shard batch over TCs
            vmem_limit_bytes=_vmem_limit_bytes(),    # generation-aware budget
        ),
    )(xp, w1p, b1p, w2p, b2p, w3p, b3p)

    return y_padded[:, :, :odim]


def init_params(key, idim, odim):
    """Deterministic synthetic params mimicking PyTorch Conv1d default init.

    Weights stored in (K=3, Cin, Cout) layout (transpose of PyTorch's
    (Cout, Cin, K) per tap); biases (1, Cout).
    """
    params = []
    dims = [(idim, odim), (odim, odim), (odim, odim)]
    for cin, cout in dims:
        kw, kb, key = jax.random.split(key, 3)
        fan_in = cin * 3
        bound = 1.0 / jnp.sqrt(fan_in)
        w = jax.random.uniform(kw, (3, cin, cout), jnp.float32, -bound, bound)
        b = jax.random.uniform(kb, (1, cout), jnp.float32, -bound, bound)
        params.append((w, b))
    return params


def _reference(x, w1, b1, w2, b2, w3, b3):
    """Pure-JAX reference of the PyTorch module (channel-last, exact GELU)."""
    def layer(h, w, b, s):
        y = jax.lax.conv_general_dilated(
            h, w, window_strides=(s,), padding="VALID",
            dimension_numbers=("NWC", "WIO", "NWC"),
            precision=jax.lax.Precision.HIGHEST)
        return jax.nn.gelu(y + b, approximate=False)
    h = layer(x, w1, b1, 1)
    h = layer(h, w2, b2, 2)
    return layer(h, w3, b3, 3)


if __name__ == "__main__":
    key = jax.random.PRNGKey(0)
    kx, kp = jax.random.split(key)

    B, T, idim, odim = 2, 32, 16, 32
    x = jax.random.normal(kx, (B, T, idim), jnp.float32)
    (w1, b1), (w2, b2), (w3, b3) = init_params(kp, idim, odim)

    y = aslp_conv1d_subsampling6(x, w1, b1, w2, b2, w3, b3)
    y = jax.block_until_ready(y)

    # Expected output time length of the three chained convs (strides 1,2,3).
    t1 = T - 2
    t2 = (t1 - 3) // 2 + 1
    t3 = (t2 - 3) // 3 + 1
    assert y.shape == (B, t3, odim), y.shape
    assert bool(jnp.all(jnp.isfinite(y)))

    # Numerical parity against a pure-JAX reference of the module.
    y_ref = _reference(x, w1, b1, w2, b2, w3, b3)
    max_err = float(jnp.max(jnp.abs(y - y_ref)))
    assert max_err < 1e-3, f"max abs err vs reference: {max_err}"

    print("KERNEL_OK")
</pallas_src>

<mosaic_0001>
module attributes {stable_mosaic.version = 11 : i64} {
  func.func @_fused_subsample6_kernel(%arg0: i32, %arg1: memref<1x32x128xf32, #tpu.memory_space<vmem>>, %arg2: memref<384x128xf32, #tpu.memory_space<vmem>>, %arg3: memref<1x128xf32, #tpu.memory_space<vmem>>, %arg4: memref<3x128x128xf32, #tpu.memory_space<vmem>>, %arg5: memref<1x128xf32, #tpu.memory_space<vmem>>, %arg6: memref<3x128x128xf32, #tpu.memory_space<vmem>>, %arg7: memref<1x128xf32, #tpu.memory_space<vmem>>, %arg8: memref<1x4x128xf32, #tpu.memory_space<vmem>>, %arg9: memref<30x128xf32, #tpu.memory_space<vmem>>, %arg10: memref<14x128xf32, #tpu.memory_space<vmem>>) attributes {dimension_semantics = [#tpu.dimension_semantics<parallel>], iteration_bounds = array<i64: 2>, scalar_prefetch = 0 : i64, scratch_operands = 2 : i64, tpu.core_type = #tpu.core_type<tc>, window_params = [{transform_indices = @transform_0, window_bounds = array<i64: 1, 32, 128>}, {pipeline_mode = #tpu.pipeline_mode<synchronous>, transform_indices = @transform_1, window_bounds = array<i64: 384, 128>}, {pipeline_mode = #tpu.pipeline_mode<synchronous>, transform_indices = @transform_2, window_bounds = array<i64: 1, 128>}, {pipeline_mode = #tpu.pipeline_mode<synchronous>, transform_indices = @transform_3, window_bounds = array<i64: 3, 128, 128>}, {pipeline_mode = #tpu.pipeline_mode<synchronous>, transform_indices = @transform_4, window_bounds = array<i64: 1, 128>}, {pipeline_mode = #tpu.pipeline_mode<synchronous>, transform_indices = @transform_5, window_bounds = array<i64: 3, 128, 128>}, {pipeline_mode = #tpu.pipeline_mode<synchronous>, transform_indices = @transform_6, window_bounds = array<i64: 1, 128>}, {transform_indices = @transform_7, window_bounds = array<i64: 1, 4, 128>}]} {
    %c0 = arith.constant 0 : index
    %c0_0 = arith.constant 0 : index
    %c0_1 = arith.constant 0 : index
    %0 = vector.load %arg1[%c0, %c0_0, %c0_1] : memref<1x32x128xf32, #tpu.memory_space<vmem>>, vector<1x30x128xf32>
    %1 = vector.shape_cast %0 : vector<1x30x128xf32> to vector<30x128xf32>
    %c0_2 = arith.constant 0 : index
    %c1 = arith.constant 1 : index
    %c0_3 = arith.constant 0 : index
    %2 = vector.load %arg1[%c0_2, %c1, %c0_3] : memref<1x32x128xf32, #tpu.memory_space<vmem>>, vector<1x30x128xf32>
    %3 = vector.shape_cast %2 : vector<1x30x128xf32> to vector<30x128xf32>
    %c0_4 = arith.constant 0 : index
    %c2 = arith.constant 2 : index
    %c0_5 = arith.constant 0 : index
    %4 = vector.load %arg1[%c0_4, %c2, %c0_5] : memref<1x32x128xf32, #tpu.memory_space<vmem>>, vector<1x30x128xf32>
    %5 = vector.shape_cast %4 : vector<1x30x128xf32> to vector<30x128xf32>
    %6 = tpu.concatenate %1, %3, %5 in 1 : vector<30x128xf32>, vector<30x128xf32>, vector<30x128xf32> -> vector<30x384xf32>
    %c0_6 = arith.constant 0 : index
    %c0_7 = arith.constant 0 : index
    %7 = vector.load %arg2[%c0_6, %c0_7] : memref<384x128xf32, #tpu.memory_space<vmem>>, vector<384x128xf32>
    %cst = arith.constant dense<0.000000e+00> : vector<30x128xf32>
    %8 = tpu.matmul %6, %7, %cst {dimension_numbers = #tpu.dot_dimension_numbers<[1], [0], [0], [1], [0, 0, 1, 1], [], []>} : vector<30x384xf32>, vector<384x128xf32>, vector<30x128xf32> -> vector<30x128xf32>
    %c0_8 = arith.constant 0 : index
    %c0_9 = arith.constant 0 : index
    %9 = vector.load %arg3[%c0_8, %c0_9] : memref<1x128xf32, #tpu.memory_space<vmem>>, vector<1x128xf32>
    %10 = vector.broadcast %9 : vector<1x128xf32> to vector<30x128xf32>
    %11 = arith.addf %8, %10 : vector<30x128xf32>
    %12 = math.absf %11 : vector<30x128xf32>
    %cst_10 = arith.constant 0.231641889 : f32
    %13 = vector.broadcast %cst_10 : f32 to vector<30x128xf32>
    %14 = arith.mulf %13, %12 : vector<30x128xf32>
    %cst_11 = arith.constant 1.000000e+00 : f32
    %15 = vector.broadcast %cst_11 : f32 to vector<30x128xf32>
    %16 = arith.addf %15, %14 : vector<30x128xf32>
    %17 = tpu.reciprocal %16 {approx = true} : vector<30x128xf32> -> vector<30x128xf32>
    %18 = arith.mulf %16, %17 : vector<30x128xf32>
    %cst_12 = arith.constant 2.000000e+00 : f32
    %19 = vector.broadcast %cst_12 : f32 to vector<30x128xf32>
    %20 = arith.subf %19, %18 : vector<30x128xf32>
    %21 = arith.mulf %17, %20 : vector<30x128xf32>
    %cst_13 = arith.constant 1.06140542 : f32
    %22 = vector.broadcast %cst_13 : f32 to vector<30x128xf32>
    %23 = arith.mulf %22, %21 : vector<30x128xf32>
    %cst_14 = arith.constant -1.45315206 : f32
    %24 = vector.broadcast %cst_14 : f32 to vector<30x128xf32>
    %25 = arith.addf %23, %24 : vector<30x128xf32>
    %26 = arith.mulf %25, %21 : vector<30x128xf32>
    %cst_15 = arith.constant 1.42141378 : f32
    %27 = vector.broadcast %cst_15 : f32 to vector<30x128xf32>
    %28 = arith.addf %26, %27 : vector<30x128xf32>
    %29 = arith.mulf %28, %21 : vector<30x128xf32>
    %cst_16 = arith.constant -0.284496725 : f32
    %30 = vector.broadcast %cst_16 : f32 to vector<30x128xf32>
    %31 = arith.addf %29, %30 : vector<30x128xf32>
    %32 = arith.mulf %31, %21 : vector<30x128xf32>
    %cst_17 = arith.constant 0.254829586 : f32
    %33 = vector.broadcast %cst_17 : f32 to vector<30x128xf32>
    %34 = arith.addf %32, %33 : vector<30x128xf32>
    %35 = arith.mulf %34, %21 : vector<30x128xf32>
    %cst_18 = arith.constant -5.000000e-01 : f32
    %36 = vector.broadcast %cst_18 : f32 to vector<30x128xf32>
    %37 = arith.mulf %36, %11 : vector<30x128xf32>
    %38 = arith.mulf %37, %11 : vector<30x128xf32>
    %39 = math.exp %38 : vector<30x128xf32>
    %40 = arith.mulf %35, %39 : vector<30x128xf32>
    %41 = arith.addf %11, %12 : vector<30x128xf32>
    %42 = arith.mulf %12, %40 : vector<30x128xf32>
    %43 = arith.subf %41, %42 : vector<30x128xf32>
    %cst_19 = arith.constant 5.000000e-01 : f32
    %44 = vector.broadcast %cst_19 : f32 to vector<30x128xf32>
    %45 = arith.mulf %44, %43 : vector<30x128xf32>
    %c0_20 = arith.constant 0 : index
    %c0_21 = arith.constant 0 : index
    %46 = vector.load %arg9[%c0_20, %c0_21] : memref<30x128xf32, #tpu.memory_space<vmem>>, vector<30x128xf32>
    tpu.vector_store %arg9[%c0_20, %c0_21], %45 {strides = array<i32>} : memref<30x128xf32, #tpu.memory_space<vmem>>, vector<30x128xf32>,
    %c0_22 = arith.constant 0 : index
    %c0_23 = arith.constant 0 : index
    %47 = tpu.strided_load %arg9[%c0_22, %c0_23] {strides = array<i32: 2, 1>} : memref<30x128xf32, #tpu.memory_space<vmem>>, vector<14x128xf32>
    %c0_24 = arith.constant 0 : index
    %c0_25 = arith.constant 0 : index
    %c0_26 = arith.constant 0 : index
    %48 = vector.load %arg4[%c0_24, %c0_25, %c0_26] : memref<3x128x128xf32, #tpu.memory_space<vmem>>, vector<1x128x128xf32>
    %49 = vector.shape_cast %48 : vector<1x128x128xf32> to vector<128x128xf32>
    %cst_27 = arith.constant dense<0.000000e+00> : vector<14x128xf32>
    %50 = tpu.matmul %47, %49, %cst_27 {dimension_numbers = #tpu.dot_dimension_numbers<[1], [0], [0], [1], [0, 0, 1, 1], [], []>} : vector<14x128xf32>, vector<128x128xf32>, vector<14x128xf32> -> vector<14x128xf32>
    %c1_28 = arith.constant 1 : index
    %c0_29 = arith.constant 0 : index
    %51 = tpu.strided_load %arg9[%c1_28, %c0_29] {strides = array<i32: 2, 1>} : memref<30x128xf32, #tpu.memory_space<vmem>>, vector<14x128xf32>
    %c1_30 = arith.constant 1 : index
    %c0_31 = arith.constant 0 : index
    %c0_32 = arith.constant 0 : index
    %52 = vector.load %arg4[%c1_30, %c0_31, %c0_32] : memref<3x128x128xf32, #tpu.memory_space<vmem>>, vector<1x128x128xf32>
    %53 = vector.shape_cast %52 : vector<1x128x128xf32> to vector<128x128xf32>
    %cst_33 = arith.constant dense<0.000000e+00> : vector<14x128xf32>
    %54 = tpu.matmul %51, %53, %cst_33 {dimension_numbers = #tpu.dot_dimension_numbers<[1], [0], [0], [1], [0, 0, 1, 1], [], []>} : vector<14x128xf32>, vector<128x128xf32>, vector<14x128xf32> -> vector<14x128xf32>
    %55 = arith.addf %50, %54 : vector<14x128xf32>
    %c2_34 = arith.constant 2 : index
    %c0_35 = arith.constant 0 : index
    %56 = tpu.strided_load %arg9[%c2_34, %c0_35] {strides = array<i32: 2, 1>} : memref<30x128xf32, #tpu.memory_space<vmem>>, vector<14x128xf32>
    %c2_36 = arith.constant 2 : index
    %c0_37 = arith.constant 0 : index
    %c0_38 = arith.constant 0 : index
    %57 = vector.load %arg4[%c2_36, %c0_37, %c0_38] : memref<3x128x128xf32, #tpu.memory_space<vmem>>, vector<1x128x128xf32>
    %58 = vector.shape_cast %57 : vector<1x128x128xf32> to vector<128x128xf32>
    %cst_39 = arith.constant dense<0.000000e+00> : vector<14x128xf32>
    %59 = tpu.matmul %56, %58, %cst_39 {dimension_numbers = #tpu.dot_dimension_numbers<[1], [0], [0], [1], [0, 0, 1, 1], [], []>} : vector<14x128xf32>, vector<128x128xf32>, vector<14x128xf32> -> vector<14x128xf32>
    %60 = arith.addf %55, %59 : vector<14x128xf32>
    %c0_40 = arith.constant 0 : index
    %c0_41 = arith.constant 0 : index
    %61 = vector.load %arg5[%c0_40, %c0_41] : memref<1x128xf32, #tpu.memory_space<vmem>>, vector<1x128xf32>
    %62 = vector.broadcast %61 : vector<1x128xf32> to vector<14x128xf32>
    %63 = arith.addf %60, %62 : vector<14x128xf32>
    %64 = math.absf %63 : vector<14x128xf32>
    %cst_42 = arith.constant 0.231641889 : f32
    %65 = vector.broadcast %cst_42 : f32 to vector<14x128xf32>
    %66 = arith.mulf %65, %64 : vector<14x128xf32>
    %cst_43 = arith.constant 1.000000e+00 : f32
    %67 = vector.broadcast %cst_43 : f32 to vector<14x128xf32>
    %68 = arith.addf %67, %66 : vector<14x128xf32>
    %69 = tpu.reciprocal %68 {approx = true} : vector<14x128xf32> -> vector<14x128xf32>
    %70 = arith.mulf %68, %69 : vector<14x128xf32>
    %cst_44 = arith.constant 2.000000e+00 : f32
    %71 = vector.broadcast %cst_44 : f32 to vector<14x128xf32>
    %72 = arith.subf %71, %70 : vector<14x128xf32>
    %73 = arith.mulf %69, %72 : vector<14x128xf32>
    %cst_45 = arith.constant 1.06140542 : f32
    %74 = vector.broadcast %cst_45 : f32 to vector<14x128xf32>
    %75 = arith.mulf %74, %73 : vector<14x128xf32>
    %cst_46 = arith.constant -1.45315206 : f32
    %76 = vector.broadcast %cst_46 : f32 to vector<14x128xf32>
    %77 = arith.addf %75, %76 : vector<14x128xf32>
    %78 = arith.mulf %77, %73 : vector<14x128xf32>
    %cst_47 = arith.constant 1.42141378 : f32
    %79 = vector.broadcast %cst_47 : f32 to vector<14x128xf32>
    %80 = arith.addf %78, %79 : vector<14x128xf32>
    %81 = arith.mulf %80, %73 : vector<14x128xf32>
    %cst_48 = arith.constant -0.284496725 : f32
    %82 = vector.broadcast %cst_48 : f32 to vector<14x128xf32>
    %83 = arith.addf %81, %82 : vector<14x128xf32>
    %84 = arith.mulf %83, %73 : vector<14x128xf32>
    %cst_49 = arith.constant 0.254829586 : f32
    %85 = vector.broadcast %cst_49 : f32 to vector<14x128xf32>
    %86 = arith.addf %84, %85 : vector<14x128xf32>
    %87 = arith.mulf %86, %73 : vector<14x128xf32>
    %cst_50 = arith.constant -5.000000e-01 : f32
    %88 = vector.broadcast %cst_50 : f32 to vector<14x128xf32>
    %89 = arith.mulf %88, %63 : vector<14x128xf32>
    %90 = arith.mulf %89, %63 : vector<14x128xf32>
    %91 = math.exp %90 : vector<14x128xf32>
    %92 = arith.mulf %87, %91 : vector<14x128xf32>
    %93 = arith.addf %63, %64 : vector<14x128xf32>
    %94 = arith.mulf %64, %92 : vector<14x128xf32>
    %95 = arith.subf %93, %94 : vector<14x128xf32>
    %cst_51 = arith.constant 5.000000e-01 : f32
    %96 = vector.broadcast %cst_51 : f32 to vector<14x128xf32>
    %97 = arith.mulf %96, %95 : vector<14x128xf32>
    %c0_52 = arith.constant 0 : index
    %c0_53 = arith.constant 0 : index
    %98 = vector.load %arg10[%c0_52, %c0_53] : memref<14x128xf32, #tpu.memory_space<vmem>>, vector<14x128xf32>
    tpu.vector_store %arg10[%c0_52, %c0_53], %97 {strides = array<i32>} : memref<14x128xf32, #tpu.memory_space<vmem>>, vector<14x128xf32>,
    %c0_54 = arith.constant 0 : index
    %c0_55 = arith.constant 0 : index
    %99 = tpu.strided_load %arg10[%c0_54, %c0_55] {strides = array<i32: 3, 1>} : memref<14x128xf32, #tpu.memory_space<vmem>>, vector<4x128xf32>
    %c0_56 = arith.constant 0 : index
    %c0_57 = arith.constant 0 : index
    %c0_58 = arith.constant 0 : index
    %100 = vector.load %arg6[%c0_56, %c0_57, %c0_58] : memref<3x128x128xf32, #tpu.memory_space<vmem>>, vector<1x128x128xf32>
    %101 = vector.shape_cast %100 : vector<1x128x128xf32> to vector<128x128xf32>
    %cst_59 = arith.constant dense<0.000000e+00> : vector<4x128xf32>
    %102 = tpu.matmul %99, %101, %cst_59 {dimension_numbers = #tpu.dot_dimension_numbers<[1], [0], [0], [1], [0, 0, 1, 1], [], []>} : vector<4x128xf32>, vector<128x128xf32>, vector<4x128xf32> -> vector<4x128xf32>
    %c1_60 = arith.constant 1 : index
    %c0_61 = arith.constant 0 : index
    %103 = tpu.strided_load %arg10[%c1_60, %c0_61] {strides = array<i32: 3, 1>} : memref<14x128xf32, #tpu.memory_space<vmem>>, vector<4x128xf32>
    %c1_62 = arith.constant 1 : index
    %c0_63 = arith.constant 0 : index
    %c0_64 = arith.constant 0 : index
    %104 = vector.load %arg6[%c1_62, %c0_63, %c0_64] : memref<3x128x128xf32, #tpu.memory_space<vmem>>, vector<1x128x128xf32>
    %105 = vector.shape_cast %104 : vector<1x128x128xf32> to vector<128x128xf32>
    %cst_65 = arith.constant dense<0.000000e+00> : vector<4x128xf32>
    %106 = tpu.matmul %103, %105, %cst_65 {dimension_numbers = #tpu.dot_dimension_numbers<[1], [0], [0], [1], [0, 0, 1, 1], [], []>} : vector<4x128xf32>, vector<128x128xf32>, vector<4x128xf32> -> vector<4x128xf32>
    %107 = arith.addf %102, %106 : vector<4x128xf32>
    %c2_66 = arith.constant 2 : index
    %c0_67 = arith.constant 0 : index
    %108 = tpu.strided_load %arg10[%c2_66, %c0_67] {strides = array<i32: 3, 1>} : memref<14x128xf32, #tpu.memory_space<vmem>>, vector<4x128xf32>
    %c2_68 = arith.constant 2 : index
    %c0_69 = arith.constant 0 : index
    %c0_70 = arith.constant 0 : index
    %109 = vector.load %arg6[%c2_68, %c0_69, %c0_70] : memref<3x128x128xf32, #tpu.memory_space<vmem>>, vector<1x128x128xf32>
    %110 = vector.shape_cast %109 : vector<1x128x128xf32> to vector<128x128xf32>
    %cst_71 = arith.constant dense<0.000000e+00> : vector<4x128xf32>
    %111 = tpu.matmul %108, %110, %cst_71 {dimension_numbers = #tpu.dot_dimension_numbers<[1], [0], [0], [1], [0, 0, 1, 1], [], []>} : vector<4x128xf32>, vector<128x128xf32>, vector<4x128xf32> -> vector<4x128xf32>
    %112 = arith.addf %107, %111 : vector<4x128xf32>
    %c0_72 = arith.constant 0 : index
    %c0_73 = arith.constant 0 : index
    %113 = vector.load %arg7[%c0_72, %c0_73] : memref<1x128xf32, #tpu.memory_space<vmem>>, vector<1x128xf32>
    %114 = vector.broadcast %113 : vector<1x128xf32> to vector<4x128xf32>
    %115 = arith.addf %112, %114 : vector<4x128xf32>
    %116 = math.absf %115 : vector<4x128xf32>
    %cst_74 = arith.constant 0.231641889 : f32
    %117 = vector.broadcast %cst_74 : f32 to vector<4x128xf32>
    %118 = arith.mulf %117, %116 : vector<4x128xf32>
    %cst_75 = arith.constant 1.000000e+00 : f32
    %119 = vector.broadcast %cst_75 : f32 to vector<4x128xf32>
    %120 = arith.addf %119, %118 : vector<4x128xf32>
    %121 = tpu.reciprocal %120 {approx = true} : vector<4x128xf32> -> vector<4x128xf32>
    %122 = arith.mulf %120, %121 : vector<4x128xf32>
    %cst_76 = arith.constant 2.000000e+00 : f32
    %123 = vector.broadcast %cst_76 : f32 to vector<4x128xf32>
    %124 = arith.subf %123, %122 : vector<4x128xf32>
    %125 = arith.mulf %121, %124 : vector<4x128xf32>
    %cst_77 = arith.constant 1.06140542 : f32
    %126 = vector.broadcast %cst_77 : f32 to vector<4x128xf32>
    %127 = arith.mulf %126, %125 : vector<4x128xf32>
    %cst_78 = arith.constant -1.45315206 : f32
    %128 = vector.broadcast %cst_78 : f32 to vector<4x128xf32>
    %129 = arith.addf %127, %128 : vector<4x128xf32>
    %130 = arith.mulf %129, %125 : vector<4x128xf32>
    %cst_79 = arith.constant 1.42141378 : f32
    %131 = vector.broadcast %cst_79 : f32 to vector<4x128xf32>
    %132 = arith.addf %130, %131 : vector<4x128xf32>
    %133 = arith.mulf %132, %125 : vector<4x128xf32>
    %cst_80 = arith.constant -0.284496725 : f32
    %134 = vector.broadcast %cst_80 : f32 to vector<4x128xf32>
    %135 = arith.addf %133, %134 : vector<4x128xf32>
    %136 = arith.mulf %135, %125 : vector<4x128xf32>
    %cst_81 = arith.constant 0.254829586 : f32
    %137 = vector.broadcast %cst_81 : f32 to vector<4x128xf32>
    %138 = arith.addf %136, %137 : vector<4x128xf32>
    %139 = arith.mulf %138, %125 : vector<4x128xf32>
    %cst_82 = arith.constant -5.000000e-01 : f32
    %140 = vector.broadcast %cst_82 : f32 to vector<4x128xf32>
    %141 = arith.mulf %140, %115 : vector<4x128xf32>
    %142 = arith.mulf %141, %115 : vector<4x128xf32>
    %143 = math.exp %142 : vector<4x128xf32>
    %144 = arith.mulf %139, %143 : vector<4x128xf32>
    %145 = arith.addf %115, %116 : vector<4x128xf32>
    %146 = arith.mulf %116, %144 : vector<4x128xf32>
    %147 = arith.subf %145, %146 : vector<4x128xf32>
    %cst_83 = arith.constant 5.000000e-01 : f32
    %148 = vector.broadcast %cst_83 : f32 to vector<4x128xf32>
    %149 = arith.mulf %148, %147 : vector<4x128xf32>
    %c0_84 = arith.constant 0 : index
    %c0_85 = arith.constant 0 : index
    %c0_86 = arith.constant 0 : index
    %150 = vector.load %arg8[%c0_84, %c0_85, %c0_86] : memref<1x4x128xf32, #tpu.memory_space<vmem>>, vector<1x4x128xf32>
    %151 = vector.shape_cast %150 : vector<1x4x128xf32> to vector<4x128xf32>
    %152 = vector.shape_cast %149 : vector<4x128xf32> to vector<1x4x128xf32>
    tpu.vector_store %arg8[%c0_84, %c0_85, %c0_86], %152 {strides = array<i32>} : memref<1x4x128xf32, #tpu.memory_space<vmem>>, vector<1x4x128xf32>,
    return
  }
  func.func @transform_0(%arg0: i32) -> (i32, i32, i32) {
    %c0_i32 = arith.constant 0 : i32
    %c0_i32_0 = arith.constant 0 : i32
    %c0_i32_1 = arith.constant 0 : i32
    return %arg0, %c0_i32, %c0_i32_0 : i32, i32, i32
  }
  func.func @transform_1(%arg0: i32) -> (i32, i32) {
    %c0_i32 = arith.constant 0 : i32
    %c0_i32_0 = arith.constant 0 : i32
    %c0_i32_1 = arith.constant 0 : i32
    return %c0_i32, %c0_i32_0 : i32, i32
  }
  func.func @transform_2(%arg0: i32) -> (i32, i32) {
    %c0_i32 = arith.constant 0 : i32
    %c0_i32_0 = arith.constant 0 : i32
    %c0_i32_1 = arith.constant 0 : i32
    return %c0_i32, %c0_i32_0 : i32, i32
  }
  func.func @transform_3(%arg0: i32) -> (i32, i32, i32) {
    %c0_i32 = arith.constant 0 : i32
    %c0_i32_0 = arith.constant 0 : i32
    %c0_i32_1 = arith.constant 0 : i32
    %c0_i32_2 = arith.constant 0 : i32
    return %c0_i32, %c0_i32_0, %c0_i32_1 : i32, i32, i32
  }
  func.func @transform_4(%arg0: i32) -> (i32, i32) {
    %c0_i32 = arith.constant 0 : i32
    %c0_i32_0 = arith.constant 0 : i32
    %c0_i32_1 = arith.constant 0 : i32
    return %c0_i32, %c0_i32_0 : i32, i32
  }
  func.func @transform_5(%arg0: i32) -> (i32, i32, i32) {
    %c0_i32 = arith.constant 0 : i32
    %c0_i32_0 = arith.constant 0 : i32
    %c0_i32_1 = arith.constant 0 : i32
    %c0_i32_2 = arith.constant 0 : i32
    return %c0_i32, %c0_i32_0, %c0_i32_1 : i32, i32, i32
  }
  func.func @transform_6(%arg0: i32) -> (i32, i32) {
    %c0_i32 = arith.constant 0 : i32
    %c0_i32_0 = arith.constant 0 : i32
    %c0_i32_1 = arith.constant 0 : i32
    return %c0_i32, %c0_i32_0 : i32, i32
  }
  func.func @transform_7(%arg0: i32) -> (i32, i32, i32) {
    %c0_i32 = arith.constant 0 : i32
    %c0_i32_0 = arith.constant 0 : i32
    %c0_i32_1 = arith.constant 0 : i32
    return %arg0, %c0_i32, %c0_i32_0 : i32, i32, i32
  }
}

</mosaic_0001>

<llo_original>
// kernel: aslp_conv1d_subsampling6.1
$region0: #{aslp_conv1d_subsampling6.1}
  #allocation0 [shape = 'u32[]', space=smem, size = 0x4, offset = 0x4, fixed_abs, tag = 'smem constant byte address 0x4 - core index']
  #allocation1 [shape = 'u32[144,128]{1,0:T(1,128)}', space=vmem, size = 0x12000, scoped, tag = 'internal scratch']
  #allocation2 [shape = 'f32[30,128]{1,0:T(8,128)}', space=vmem, size = 0x4000, scoped, tag = 'scratch operand']
  #allocation3 [shape = 'f32[14,128]{1,0:T(8,128)}', space=vmem, size = 0x2000, scoped, tag = 'scratch operand']
  %s0 = inlined_call_operand.hbm [shape: f32[2,32,128], index: 0, kind: input, shape index: {}]
  %s1 = inlined_call_operand.hbm [shape: f32[384,128], index: 1, kind: input, shape index: {}]
  %s2 = inlined_call_operand.hbm [shape: f32[1,128], index: 2, kind: input, shape index: {}]
  %s3 = inlined_call_operand.hbm [shape: f32[3,128,128], index: 3, kind: input, shape index: {}]
  %s4 = inlined_call_operand.hbm [shape: f32[1,128], index: 4, kind: input, shape index: {}]
  %s5 = inlined_call_operand.hbm [shape: f32[3,128,128], index: 5, kind: input, shape index: {}]
  %s6 = inlined_call_operand.hbm [shape: f32[1,128], index: 6, kind: input, shape index: {}]
  %s7 = inlined_call_operand.hbm [shape: f32[2,4,128], index: 7, kind: output, shape index: {}]
  %s8 = sld [smem:[#allocation0]]
  $region89: #{aslp_conv1d_subsampling6.1} parent=0
    _
  %s10 = ssub.s32 1, %s8
  %s11 = scalar_select 0, %s10, %s8
  $region1: #{aslp_conv1d_subsampling6.1} parent=0
    #allocation4 [shape = 'u8[32768]{0}', space=vmem, size = 0x8000, scoped, tag = 'input window, operand 0']
    #allocation5 [shape = 's32[2]{0}', space=sflag, size = 0x8, scoped, tag = 'scoped memory for aslp_conv1d_subsampling6.1']
    #allocation6 [shape = 's32[2]{0}', space=sflag, size = 0x8, scoped, tag = 'scoped memory for aslp_conv1d_subsampling6.1']
    #allocation7 [shape = 'u8[196608]{0}', space=vmem, size = 0x30000, scoped, tag = 'input window, operand 1, single buffered']
    #allocation8 [shape = 's32[1]{0}', space=sflag, size = 0x4, scoped, tag = 'scoped memory for aslp_conv1d_subsampling6.1']
    #allocation9 [shape = 'u8[512]{0}', space=vmem, size = 0x400, scoped, tag = 'input window, operand 2, single buffered']
    #allocation10 [shape = 'u8[196608]{0}', space=vmem, size = 0x30000, scoped, tag = 'input window, operand 3, single buffered']
    #allocation11 [shape = 's32[1]{0}', space=sflag, size = 0x4, scoped, tag = 'scoped memory for aslp_conv1d_subsampling6.1']
    #allocation12 [shape = 'u8[512]{0}', space=vmem, size = 0x400, scoped, tag = 'input window, operand 4, single buffered']
    #allocation13 [shape = 'u8[196608]{0}', space=vmem, size = 0x30000, scoped, tag = 'input window, operand 5, single buffered']
    #allocation14 [shape = 's32[1]{0}', space=sflag, size = 0x4, scoped, tag = 'scoped memory for aslp_conv1d_subsampling6.1']
    #allocation15 [shape = 'u8[512]{0}', space=vmem, size = 0x400, scoped, tag = 'input window, operand 6, single buffered']
    #allocation16 [shape = 'u8[4096]{0}', space=vmem, size = 0x1000, scoped, tag = 'output window, operand 0']
    %12 = vsyncpa [#allocation5], 0
    %s13 = scalar_lea.sflag [#allocation5], 1
    %14 = vsyncpa %s13, 0
    %15 = vsyncpa [#allocation8], 0
    %16 = vsyncpa [#allocation11], 0
    %17 = vsyncpa [#allocation14], 0
    %18 = vsyncpa [#allocation6], 0
    %s19 = scalar_lea.sflag [#allocation6], 1
    %20 = vsyncpa %s19, 0
    loop: start=0, step=1, limit=4
    $region2: #{aslp_conv1d_subsampling6.1} parent=1 // loop_pre_header
      _
    $region3: #{aslp_conv1d_subsampling6.1} parent=1 // loop_header
      %s22 = sphi 0, %s26
      %p23 = scmp.ge.s32.totalorder %s22, 4
      %s32 = sphi 0, %s34
      %s35 = sphi 0, %s32
      %s36 = sphi 0, %s35
      %s52 = sphi 0, %s36
      %s56 = sphi 0, %s56
      %s58 = sphi 0, %s56
      %s59 = sphi 0, %s58
      %s73 = sphi 0, %s59
      %s77 = sphi 0, %s77
      %s79 = sphi 0, %s77
      %s80 = sphi 0, %s79
      %s94 = sphi 0, %s80
      %s98 = sphi 0, %s98
      %s100 = sphi 0, %s98
      %s101 = sphi 0, %s100
      %s115 = sphi 0, %s101
      %s119 = sphi 0, %s119
      %s121 = sphi 0, %s119
      %s122 = sphi 0, %s121
      %s136 = sphi 0, %s122
      %s140 = sphi 0, %s140
      %s142 = sphi 0, %s140
      %s143 = sphi 0, %s142
      %s157 = sphi 0, %s143
      %s161 = sphi 0, %s161
      %s163 = sphi 0, %s161
      %s164 = sphi 0, %s163
      %s178 = sphi 0, %s164
      %s184 = sphi 0, %s186
      %s187 = sphi 0, %s184
      %s188 = sphi 0, %s187
      %s204 = sphi 0, %s188
    $region4: #{aslp_conv1d_subsampling6.1} parent=1 // loop_header_branch
      %25 = sbr.rel (%p23) target = $region8
    $region5: #{aslp_conv1d_subsampling6.1} parent=1 // loop_body
      %s27 = ssub.s32 %s22, 1
      %s28 = ssub.s32 %s22, 2
      %s29 = sadd.s32 %s22, 1
      %s30 = ssub.s32 %s22, %s29
      %p31 = scmp.eq.s32.totalorder %s30, 0
      %s33 = sadd.s32 %s32, 1
      %s34 = scalar_select %p31, %s32, %s33
      %p37 = pneg %p31
      %p38 = scmp.eq.s32.totalorder %s22, 1
      %p39 = por %p37, %p38
      %p40 = scmp.ne.s32.totalorder %s32, %s35
      %p41 = scmp.eq.s32.totalorder %s22, 0
      %p42 = por %p40, %p41
      %p43 = scmp.ne.s32.totalorder %s32, %s35
      %p44 = scmp.eq.s32.totalorder %s27, 1
      %p45 = por %p43, %p44
      %p46 = scmp.ne.s32.totalorder %s35, %s36
      %p47 = scmp.eq.s32.totalorder %s27, 0
      %p48 = por %p46, %p47
      %p49 = scmp.ne.s32.totalorder %s35, %s36
      %p50 = scmp.eq.s32.totalorder %s28, 1
      %p51 = por %p49, %p50
      %p53 = scmp.ne.s32.totalorder %s36, %s52
      %p54 = scmp.eq.s32.totalorder %s28, 0
      %p55 = por %p53, %p54
      %s57 = sadd.s32 %s56, 1
      %p60 = scmp.eq.s32.totalorder %s22, 1
      %p61 = scmp.ne.s32.totalorder %s56, %s58
      %p62 = scmp.eq.s32.totalorder %s22, 0
      %p63 = por %p61, %p62
      %p64 = scmp.ne.s32.totalorder %s56, %s58
      %p65 = scmp.eq.s32.totalorder %s27, 1
      %p66 = por %p64, %p65
      %p67 = scmp.ne.s32.totalorder %s58, %s59
      %p68 = scmp.eq.s32.totalorder %s27, 0
      %p69 = por %p67, %p68
      %p70 = scmp.ne.s32.totalorder %s58, %s59
      %p71 = scmp.eq.s32.totalorder %s28, 1
      %p72 = por %p70, %p71
      %p74 = scmp.ne.s32.totalorder %s59, %s73
      %p75 = scmp.eq.s32.totalorder %s28, 0
      %p76 = por %p74, %p75
      %s78 = sadd.s32 %s77, 1
      %p81 = scmp.eq.s32.totalorder %s22, 1
      %p82 = scmp.ne.s32.totalorder %s77, %s79
      %p83 = scmp.eq.s32.totalorder %s22, 0
      %p84 = por %p82, %p83
      %p85 = scmp.ne.s32.totalorder %s77, %s79
      %p86 = scmp.eq.s32.totalorder %s27, 1
      %p87 = por %p85, %p86
      %p88 = scmp.ne.s32.totalorder %s79, %s80
      %p89 = scmp.eq.s32.totalorder %s27, 0
      %p90 = por %p88, %p89
      %p91 = scmp.ne.s32.totalorder %s79, %s80
      %p92 = scmp.eq.s32.totalorder %s28, 1
      %p93 = por %p91, %p92
      %p95 = scmp.ne.s32.totalorder %s80, %s94
      %p96 = scmp.eq.s32.totalorder %s28, 0
      %p97 = por %p95, %p96
      %s99 = sadd.s32 %s98, 1
      %p102 = scmp.eq.s32.totalorder %s22, 1
      %p103 = scmp.ne.s32.totalorder %s98, %s100
      %p104 = scmp.eq.s32.totalorder %s22, 0
      %p105 = por %p103, %p104
      %p106 = scmp.ne.s32.totalorder %s98, %s100
      %p107 = scmp.eq.s32.totalorder %s27, 1
      %p108 = por %p106, %p107
      %p109 = scmp.ne.s32.totalorder %s100, %s101
      %p110 = scmp.eq.s32.totalorder %s27, 0
      %p111 = por %p109, %p110
      %p112 = scmp.ne.s32.totalorder %s100, %s101
      %p113 = scmp.eq.s32.totalorder %s28, 1
      %p114 = por %p112, %p113
      %p116 = scmp.ne.s32.totalorder %s101, %s115
      %p117 = scmp.eq.s32.totalorder %s28, 0
      %p118 = por %p116, %p117
      %s120 = sadd.s32 %s119, 1
      %p123 = scmp.eq.s32.totalorder %s22, 1
      %p124 = scmp.ne.s32.totalorder %s119, %s121
      %p125 = scmp.eq.s32.totalorder %s22, 0
      %p126 = por %p124, %p125
      %p127 = scmp.ne.s32.totalorder %s119, %s121
      %p128 = scmp.eq.s32.totalorder %s27, 1
      %p129 = por %p127, %p128
      %p130 = scmp.ne.s32.totalorder %s121, %s122
      %p131 = scmp.eq.s32.totalorder %s27, 0
      %p132 = por %p130, %p131
      %p133 = scmp.ne.s32.totalorder %s121, %s122
      %p134 = scmp.eq.s32.totalorder %s28, 1
      %p135 = por %p133, %p134
      %p137 = scmp.ne.s32.totalorder %s122, %s136
      %p138 = scmp.eq.s32.totalorder %s28, 0
      %p139 = por %p137, %p138
      %s141 = sadd.s32 %s140, 1
      %p144 = scmp.eq.s32.totalorder %s22, 1
      %p145 = scmp.ne.s32.totalorder %s140, %s142
      %p146 = scmp.eq.s32.totalorder %s22, 0
      %p147 = por %p145, %p146
      %p148 = scmp.ne.s32.totalorder %s140, %s142
      %p149 = scmp.eq.s32.totalorder %s27, 1
      %p150 = por %p148, %p149
      %p151 = scmp.ne.s32.totalorder %s142, %s143
      %p152 = scmp.eq.s32.totalorder %s27, 0
      %p153 = por %p151, %p152
      %p154 = scmp.ne.s32.totalorder %s142, %s143
      %p155 = scmp.eq.s32.totalorder %s28, 1
      %p156 = por %p154, %p155
      %p158 = scmp.ne.s32.totalorder %s143, %s157
      %p159 = scmp.eq.s32.totalorder %s28, 0
      %p160 = por %p158, %p159
      %s162 = sadd.s32 %s161, 1
      %p165 = scmp.eq.s32.totalorder %s22, 1
      %p166 = scmp.ne.s32.totalorder %s161, %s163
      %p167 = scmp.eq.s32.totalorder %s22, 0
      %p168 = por %p166, %p167
      %p169 = scmp.ne.s32.totalorder %s161, %s163
      %p170 = scmp.eq.s32.totalorder %s27, 1
      %p171 = por %p169, %p170
      %p172 = scmp.ne.s32.totalorder %s163, %s164
      %p173 = scmp.eq.s32.totalorder %s27, 0
      %p174 = por %p172, %p173
      %p175 = scmp.ne.s32.totalorder %s163, %s164
      %p176 = scmp.eq.s32.totalorder %s28, 1
      %p177 = por %p175, %p176
      %p179 = scmp.ne.s32.totalorder %s164, %s178
      %p180 = scmp.eq.s32.totalorder %s28, 0
      %p181 = por %p179, %p180
      %s182 = ssub.s32 %s22, %s29
      %p183 = scmp.eq.s32.totalorder %s182, 0
      %s185 = sadd.s32 %s184, 1
      %s186 = scalar_select %p183, %s184, %s185
      %p189 = pneg %p183
      %p190 = scmp.eq.s32.totalorder %s22, 1
      %p191 = por %p189, %p190
      %p192 = scmp.ne.s32.totalorder %s184, %s187
      %p193 = scmp.eq.s32.totalorder %s22, 0
      %p194 = por %p192, %p193
      %p195 = scmp.ne.s32.totalorder %s184, %s187
      %p196 = scmp.eq.s32.totalorder %s27, 1
      %p197 = por %p195, %p196
      %p198 = scmp.ne.s32.totalorder %s187, %s188
      %p199 = scmp.eq.s32.totalorder %s27, 0
      %p200 = por %p198, %p199
      %p201 = scmp.ne.s32.totalorder %s187, %s188
      %p202 = scmp.eq.s32.totalorder %s28, 1
      %p203 = por %p201, %p202
      %p205 = scmp.ne.s32.totalorder %s188, %s204
      %p206 = scmp.eq.s32.totalorder %s28, 0
      %p207 = por %p205, %p206
      %p208 = scmp.le.s32.totalorder 1, %s22
      %p209 = scmp.lt.s32.totalorder %s22, 3
      %p210 = pnand %p208, %p209
      %p211 = pneg %p210
      // Predicated region
      $region9: #{aslp_conv1d_subsampling6.1} parent=5 // pred_check
        _
      $region10: #{aslp_conv1d_subsampling6.1} parent=5 // pred_check_branch
        %213 = sbr.rel (%p210) target = $region12
      $region11: #{aslp_conv1d_subsampling6.1} parent=5 // pred_region
        %s214 = ssub.s32 %s22, 1
        // Predicated region
        $region13: #{aslp_conv1d_subsampling6.1} parent=11 // pred_check
          %p215 = pneg %p69
        $region14: #{aslp_conv1d_subsampling6.1} parent=11 // pred_check_branch
          %217 = sbr.rel (%p215) target = $region16
        $region15: #{aslp_conv1d_subsampling6.1} parent=11 // pred_region
          %s219 = ssub.s32 6144, 6144
          %220 = vsyncadd [#allocation8], %s219
          %s221 = sshll.u32 [#allocation7], 4
          %s222 = int_to_ptr.vmem [resolvable:$true] %s221
          %227 = dma.hbm_to_vmem [thread:$0]  %s1, 6144, %s222, [#allocation8], 128, 128, 8
        $region16: #{aslp_conv1d_subsampling6.1} parent=11 // pred_fallthru
          _
        // Predicated region
        $region17: #{aslp_conv1d_subsampling6.1} parent=11 // pred_check
          %p228 = pneg %p90
        $region18: #{aslp_conv1d_subsampling6.1} parent=11 // pred_check_branch
          %230 = sbr.rel (%p228) target = $region20
        $region19: #{aslp_conv1d_subsampling6.1} parent=11 // pred_region
          %s232 = ssub.s32 16, 16
          %233 = vsyncadd [#allocation8], %s232
          %s235 = sshll.u32 [#allocation9], 4
          %s236 = int_to_ptr.vmem [resolvable:$true] %s235
          %238 = dma.hbm_to_vmem [thread:$0]  %s2, 16, %s236, [#allocation8]
        $region20: #{aslp_conv1d_subsampling6.1} parent=11 // pred_fallthru
          _
        // Predicated region
        $region21: #{aslp_conv1d_subsampling6.1} parent=11 // pred_check
          %p239 = pneg %p111
        $region22: #{aslp_conv1d_subsampling6.1} parent=11 // pred_check_branch
          %241 = sbr.rel (%p239) target = $region24
        $region23: #{aslp_conv1d_subsampling6.1} parent=11 // pred_region
          %s243 = ssub.s32 6144, 6144
          %244 = vsyncadd [#allocation11], %s243
          %s245 = sshll.u32 [#allocation10], 4
          %s246 = int_to_ptr.vmem [resolvable:$true] %s245
          %251 = dma.hbm_to_vmem [thread:$0]  %s3, 6144, %s246, [#allocation11], 128, 128, 8
        $region24: #{aslp_conv1d_subsampling6.1} parent=11 // pred_fallthru
          _
        // Predicated region
        $region25: #{aslp_conv1d_subsampling6.1} parent=11 // pred_check
          %p252 = pneg %p132
        $region26: #{aslp_conv1d_subsampling6.1} parent=11 // pred_check_branch
          %254 = sbr.rel (%p252) target = $region28
        $region27: #{aslp_conv1d_subsampling6.1} parent=11 // pred_region
          %s256 = ssub.s32 16, 16
          %257 = vsyncadd [#allocation11], %s256
          %s259 = sshll.u32 [#allocation12], 4
          %s260 = int_to_ptr.vmem [resolvable:$true] %s259
          %262 = dma.hbm_to_vmem [thread:$0]  %s4, 16, %s260, [#allocation11]
        $region28: #{aslp_conv1d_subsampling6.1} parent=11 // pred_fallthru
          _
        // Predicated region
        $region29: #{aslp_conv1d_subsampling6.1} parent=11 // pred_check
          %p263 = pneg %p153
        $region30: #{aslp_conv1d_subsampling6.1} parent=11 // pred_check_branch
          %265 = sbr.rel (%p263) target = $region32
        $region31: #{aslp_conv1d_subsampling6.1} parent=11 // pred_region
          %s267 = ssub.s32 6144, 6144
          %268 = vsyncadd [#allocation14], %s267
          %s269 = sshll.u32 [#allocation13], 4
          %s270 = int_to_ptr.vmem [resolvable:$true] %s269
          %275 = dma.hbm_to_vmem [thread:$0]  %s5, 6144, %s270, [#allocation14], 128, 128, 8
        $region32: #{aslp_conv1d_subsampling6.1} parent=11 // pred_fallthru
          _
        // Predicated region
        $region33: #{aslp_conv1d_subsampling6.1} parent=11 // pred_check
          %p276 = pneg %p174
        $region34: #{aslp_conv1d_subsampling6.1} parent=11 // pred_check_branch
          %278 = sbr.rel (%p276) target = $region36
        $region35: #{aslp_conv1d_subsampling6.1} parent=11 // pred_region
          %s280 = ssub.s32 16, 16
          %281 = vsyncadd [#allocation14], %s280
          %s283 = sshll.u32 [#allocation15], 4
          %s284 = int_to_ptr.vmem [resolvable:$true] %s283
          %286 = dma.hbm_to_vmem [thread:$0]  %s6, 16, %s284, [#allocation14]
        $region36: #{aslp_conv1d_subsampling6.1} parent=11 // pred_fallthru
          _
      $region12: #{aslp_conv1d_subsampling6.1} parent=5 // pred_fallthru
        _
      %p287 = scmp.lt.s32.totalorder %s22, 2
      // Predicated region
      $region37: #{aslp_conv1d_subsampling6.1} parent=5 // pred_check
        %p288 = pneg %p287
      $region38: #{aslp_conv1d_subsampling6.1} parent=5 // pred_check_branch
        %290 = sbr.rel (%p288) target = $region40
      $region39: #{aslp_conv1d_subsampling6.1} parent=5 // pred_region
        // Predicated region
        $region41: #{aslp_conv1d_subsampling6.1} parent=39 // pred_check
          %p291 = pneg %p42
        $region42: #{aslp_conv1d_subsampling6.1} parent=39 // pred_check_branch
          %293 = sbr.rel (%p291) target = $region44
        $region43: #{aslp_conv1d_subsampling6.1} parent=39 // pred_region
          %s294 = sand.u32 %s32, 1
          %s295 = scalar_lea.sflag [#allocation5], %s294
          %s296 = sand.u32 %s32, 1
          %s297 = smul.addr %s296, 32
          %s298 = scalar_lea.vmem [#allocation4], %s297
          %s300 = ssub.s32 512, 512
          %301 = vsyncadd %s295, %s300
          %s302 = smul.addr %s22, 4
          %s303 = smul.addr %s302, 128
          %s304 = scalar_lea.hbm %s0, %s303
          %s305 = sshll.u32 %s298, 4
          %s306 = int_to_ptr.vmem [resolvable:$true] %s305
          %311 = dma.hbm_to_vmem [thread:$0]  %s304, 512, %s306, %s295, 128, 128, 8
        $region44: #{aslp_conv1d_subsampling6.1} parent=39 // pred_fallthru
          _
      $region40: #{aslp_conv1d_subsampling6.1} parent=5 // pred_fallthru
        _
      %p312 = scmp.le.s32.totalorder 1, %s22
      %p313 = scmp.lt.s32.totalorder %s22, 3
      %p314 = pnand %p312, %p313
      %p315 = pneg %p314
      // Predicated region
      $region45: #{aslp_conv1d_subsampling6.1} parent=5 // pred_check
        _
      $region46: #{aslp_conv1d_subsampling6.1} parent=5 // pred_check_branch
        %317 = sbr.rel (%p314) target = $region48
      $region47: #{aslp_conv1d_subsampling6.1} parent=5 // pred_region
        %s318 = ssub.s32 %s22, 1
        %s319 = sand.u32 %s35, 1
        %s320 = scalar_lea.sflag [#allocation5], %s319
        %s321 = sand.u32 %s35, 1
        %s322 = smul.addr %s321, 32
        %s323 = scalar_lea.vmem [#allocation4], %s322
        // Predicated region
        $region49: #{aslp_conv1d_subsampling6.1} parent=47 // pred_check
          %p324 = pneg %p48
        $region50: #{aslp_conv1d_subsampling6.1} parent=47 // pred_check_branch
          %326 = sbr.rel (%p324) target = $region52
        $region51: #{aslp_conv1d_subsampling6.1} parent=47 // pred_region
          %327 = dma.done %s320, 512
        $region52: #{aslp_conv1d_subsampling6.1} parent=47 // pred_fallthru
          _
        // Predicated region
        $region53: #{aslp_conv1d_subsampling6.1} parent=47 // pred_check
          %p328 = pneg %p69
        $region54: #{aslp_conv1d_subsampling6.1} parent=47 // pred_check_branch
          %330 = sbr.rel (%p328) target = $region56
        $region55: #{aslp_conv1d_subsampling6.1} parent=47 // pred_region
          %331 = dma.done [#allocation8], 6144
        $region56: #{aslp_conv1d_subsampling6.1} parent=47 // pred_fallthru
          _
        // Predicated region
        $region57: #{aslp_conv1d_subsampling6.1} parent=47 // pred_check
          %p332 = pneg %p90
        $region58: #{aslp_conv1d_subsampling6.1} parent=47 // pred_check_branch
          %334 = sbr.rel (%p332) target = $region60
        $region59: #{aslp_conv1d_subsampling6.1} parent=47 // pred_region
          %335 = dma.done [#allocation8], 16
        $region60: #{aslp_conv1d_subsampling6.1} parent=47 // pred_fallthru
          _
        // Predicated region
        $region61: #{aslp_conv1d_subsampling6.1} parent=47 // pred_check
          %p336 = pneg %p111
        $region62: #{aslp_conv1d_subsampling6.1} parent=47 // pred_check_branch
          %338 = sbr.rel (%p336) target = $region64
        $region63: #{aslp_conv1d_subsampling6.1} parent=47 // pred_region
          %339 = dma.done [#allocation11], 6144
        $region64: #{aslp_conv1d_subsampling6.1} parent=47 // pred_fallthru
          _
        // Predicated region
        $region65: #{aslp_conv1d_subsampling6.1} parent=47 // pred_check
          %p340 = pneg %p132
        $region66: #{aslp_conv1d_subsampling6.1} parent=47 // pred_check_branch
          %342 = sbr.rel (%p340) target = $region68
        $region67: #{aslp_conv1d_subsampling6.1} parent=47 // pred_region
          %343 = dma.done [#allocation11], 16
        $region68: #{aslp_conv1d_subsampling6.1} parent=47 // pred_fallthru
          _
        // Predicated region
        $region69: #{aslp_conv1d_subsampling6.1} parent=47 // pred_check
          %p344 = pneg %p153
        $region70: #{aslp_conv1d_subsampling6.1} parent=47 // pred_check_branch
          %346 = sbr.rel (%p344) target = $region72
        $region71: #{aslp_conv1d_subsampling6.1} parent=47 // pred_region
          %347 = dma.done [#allocation14], 6144
        $region72: #{aslp_conv1d_subsampling6.1} parent=47 // pred_fallthru
          _
        // Predicated region
        $region73: #{aslp_conv1d_subsampling6.1} parent=47 // pred_check
          %p348 = pneg %p174
        $region74: #{aslp_conv1d_subsampling6.1} parent=47 // pred_check_branch
          %350 = sbr.rel (%p348) target = $region76
        $region75: #{aslp_conv1d_subsampling6.1} parent=47 // pred_region
          %351 = dma.done [#allocation14], 16
        $region76: #{aslp_conv1d_subsampling6.1} parent=47 // pred_fallthru
          _
        %s352 = sand.u32 %s35, 1
        %s353 = scalar_lea.sflag [#allocation5], %s352
        %s354 = sand.u32 %s35, 1
        %s355 = smul.addr %s354, 32
        %s356 = scalar_lea.vmem [#allocation4], %s355
        %p357 = pneg %p48
        %p358 = pneg %p45
        %p359 = pneg %p69
        %p360 = pneg %p66
        %p361 = pneg %p90
        %p362 = pneg %p87
        %p363 = pneg %p111
        %p364 = pneg %p108
        %p365 = pneg %p132
        %p366 = pneg %p129
        %p367 = pneg %p153
        %p368 = pneg %p150
        %p369 = pneg %p174
        %p370 = pneg %p171
        %p371 = pneg %p200
        %p372 = pneg %p197
        %s373 = sand.u32 %s187, 1
        %s374 = scalar_lea.sflag [#allocation6], %s373
        %s375 = sand.u32 %s187, 1
        %s376 = smul.addr %s375, 4
        %s377 = scalar_lea.vmem [#allocation16], %s376
        %v378 = vld [vmem:[%s323] sm:$0xff]
        %v379 = vld [vmem:[%s323 + $0x8] sm:$0xff]
        %v380 = vld [vmem:[%s323 + $0x10] sm:$0xff]
        %v381 = vld [vmem:[%s323 + $0x18] sm:$0x3f]
        %v382 = vld [vmem:[%s323 + $0x1] sm:$0xff]
        %v383 = vld [vmem:[%s323 + $0x9] sm:$0xff]
        %v384 = vld [vmem:[%s323 + $0x11] sm:$0xff]
        %v385 = vld [vmem:[%s323 + $0x19] sm:$0x3f]
        %v386 = vld [vmem:[%s323 + $0x2] sm:$0xff]
        %v387 = vld [vmem:[%s323 + $0xa] sm:$0xff]
        %v388 = vld [vmem:[%s323 + $0x12] sm:$0xff]
        %v389 = vld [vmem:[%s323 + $0x1a] sm:$0x3f]
        %v390 = vld [vmem:[#allocation7] sm:$0xff]
        %v391 = vld [vmem:[#allocation7 + $0x8] sm:$0xff]
        %v392 = vld [vmem:[#allocation7 + $0x10] sm:$0xff]
        %v393 = vld [vmem:[#allocation7 + $0x18] sm:$0xff]
        %v394 = vld [vmem:[#allocation7 + $0x20] sm:$0xff]
        %v395 = vld [vmem:[#allocation7 + $0x28] sm:$0xff]
        %v396 = vld [vmem:[#allocation7 + $0x30] sm:$0xff]
        %v397 = vld [vmem:[#allocation7 + $0x38] sm:$0xff]
        %v398 = vld [vmem:[#allocation7 + $0x40] sm:$0xff]
        %v399 = vld [vmem:[#allocation7 + $0x48] sm:$0xff]
        %v400 = vld [vmem:[#allocation7 + $0x50] sm:$0xff]
        %v401 = vld [vmem:[#allocation7 + $0x58] sm:$0xff]
        %v402 = vld [vmem:[#allocation7 + $0x60] sm:$0xff]
        %v403 = vld [vmem:[#allocation7 + $0x68] sm:$0xff]
        %v404 = vld [vmem:[#allocation7 + $0x70] sm:$0xff]
        %v405 = vld [vmem:[#allocation7 + $0x78] sm:$0xff]
        %v406 = vld [vmem:[#allocation7 + $0x80] sm:$0xff]
        %v407 = vld [vmem:[#allocation7 + $0x88] sm:$0xff]
        %v408 = vld [vmem:[#allocation7 + $0x90] sm:$0xff]
        %v409 = vld [vmem:[#allocation7 + $0x98] sm:$0xff]
        %v410 = vld [vmem:[#allocation7 + $0xa0] sm:$0xff]
        %v411 = vld [vmem:[#allocation7 + $0xa8] sm:$0xff]
        %v412 = vld [vmem:[#allocation7 + $0xb0] sm:$0xff]
        %v413 = vld [vmem:[#allocation7 + $0xb8] sm:$0xff]
        %v414 = vld [vmem:[#allocation7 + $0xc0] sm:$0xff]
        %v415 = vld [vmem:[#allocation7 + $0xc8] sm:$0xff]
        %v416 = vld [vmem:[#allocation7 + $0xd0] sm:$0xff]
        %v417 = vld [vmem:[#allocation7 + $0xd8] sm:$0xff]
        %v418 = vld [vmem:[#allocation7 + $0xe0] sm:$0xff]
        %v419 = vld [vmem:[#allocation7 + $0xe8] sm:$0xff]
        %v420 = vld [vmem:[#allocation7 + $0xf0] sm:$0xff]
        %v421 = vld [vmem:[#allocation7 + $0xf8] sm:$0xff]
        %v422 = vld [vmem:[#allocation7 + $0x100] sm:$0xff]
        %v423 = vld [vmem:[#allocation7 + $0x108] sm:$0xff]
        %v424 = vld [vmem:[#allocation7 + $0x110] sm:$0xff]
        %v425 = vld [vmem:[#allocation7 + $0x118] sm:$0xff]
        %v426 = vld [vmem:[#allocation7 + $0x120] sm:$0xff]
        %v427 = vld [vmem:[#allocation7 + $0x128] sm:$0xff]
        %v428 = vld [vmem:[#allocation7 + $0x130] sm:$0xff]
        %v429 = vld [vmem:[#allocation7 + $0x138] sm:$0xff]
        %v430 = vld [vmem:[#allocation7 + $0x140] sm:$0xff]
        %v431 = vld [vmem:[#allocation7 + $0x148] sm:$0xff]
        %v432 = vld [vmem:[#allocation7 + $0x150] sm:$0xff]
        %v433 = vld [vmem:[#allocation7 + $0x158] sm:$0xff]
        %v434 = vld [vmem:[#allocation7 + $0x160] sm:$0xff]
        %v435 = vld [vmem:[#allocation7 + $0x168] sm:$0xff]
        %v436 = vld [vmem:[#allocation7 + $0x170] sm:$0xff]
        %v437 = vld [vmem:[#allocation7 + $0x178] sm:$0xff]
        %v438 = vld [vmem:[#allocation9] sm:$0x1]
        %v440 = vlaneseq
        %v441 = vshrl.u32 %v440, 7
        %v442 = vsub.s32 0, %v441
        %v443 = vrot.slane %v438, %v442
        %445 = vmatprep.subr.mxu0 0.0
        %446 = vmatpush1.msra.mxu0 %v390
        %447 = vmatprep.subr.mxu0 0.0
        %448 = vmatpush1.msra.mxu0 %v391
        %449 = vmatprep.subr.mxu0 0.0
        %450 = vmatpush1.msra.mxu0 %v392
        %451 = vmatprep.subr.mxu0 0.0
        %452 = vmatpush1.msra.mxu0 %v393
        %453 = vmatprep.subr.mxu0 0.0
        %454 = vmatpush1.msra.mxu0 %v394
        %455 = vmatprep.subr.mxu0 0.0
        %456 = vmatpush1.msra.mxu0 %v395
        %457 = vmatprep.subr.mxu0 0.0
        %458 = vmatpush1.msra.mxu0 %v396
        %459 = vmatprep.subr.mxu0 0.0
        %460 = vmatpush1.msra.mxu0 %v397
        %461 = vmatprep.subr.mxu0 0.0
        %462 = vmatpush1.msra.mxu0 %v398
        %463 = vmatprep.subr.mxu0 0.0
        %464 = vmatpush1.msra.mxu0 %v399
        %465 = vmatprep.subr.mxu0 0.0
        %466 = vmatpush1.msra.mxu0 %v400
        %467 = vmatprep.subr.mxu0 0.0
        %468 = vmatpush1.msra.mxu0 %v401
        %469 = vmatprep.subr.mxu0 0.0
        %470 = vmatpush1.msra.mxu0 %v402
        %471 = vmatprep.subr.mxu0 0.0
        %472 = vmatpush1.msra.mxu0 %v403
        %473 = vmatprep.subr.mxu0 0.0
        %474 = vmatpush1.msra.mxu0 %v404
        %475 = vmatprep.subr.mxu0 0.0
        %476 = vmatpush1.msra.mxu0 %v405
        %477 = vmatprep.subr.mxu0 0.0
        %478 = vmatpush1.msra.mxu0 %v406
        %479 = vmatprep.subr.mxu0 0.0
        %480 = vmatpush1.msra.mxu0 %v407
        %481 = vmatprep.subr.mxu0 0.0
        %482 = vmatpush1.msra.mxu0 %v408
        %483 = vmatprep.subr.mxu0 0.0
        %484 = vmatpush1.msra.mxu0 %v409
        %485 = vmatprep.subr.mxu0 0.0
        %486 = vmatpush1.msra.mxu0 %v410
        %487 = vmatprep.subr.mxu0 0.0
        %488 = vmatpush1.msra.mxu0 %v411
        %489 = vmatprep.subr.mxu0 0.0
        %490 = vmatpush1.msra.mxu0 %v412
        %491 = vmatprep.subr.mxu0 0.0
        %492 = vmatpush1.msra.mxu0 %v413
        %493 = vmatprep.subr.mxu0 0.0
        %494 = vmatpush1.msra.mxu0 %v414
        %495 = vmatprep.subr.mxu0 0.0
        %496 = vmatpush1.msra.mxu0 %v415
        %497 = vmatprep.subr.mxu0 0.0
        %498 = vmatpush1.msra.mxu0 %v416
        %499 = vmatprep.subr.mxu0 0.0
        %500 = vmatpush1.msra.mxu0 %v417
        %501 = vmatprep.subr.mxu0 0.0
        %502 = vmatpush1.msra.mxu0 %v418
        %503 = vmatprep.subr.mxu0 0.0
        %504 = vmatpush1.msra.mxu0 %v419
        %505 = vmatprep.subr.mxu0 0.0
        %506 = vmatpush1.msra.mxu0 %v420
        %507 = vmatprep.subr.mxu0 0.0
        %508 = vmatpush1.msra.mxu0 %v421
        %509 = vmatprep.mubr.f32.mxu0 %v382
        %510 = vmatmul.mubr.f32.gmra.mrb[0].mxu0 %v378
        %v511 = vpop.f32.mrb[0].mxu0
        %v512 = vadd.f32 %v443, %v511
        %v513 = vpop.f32.mrb[0].mxu0
        %514 = vmatprep.mubr.f32.mxu0 %v383
        %515 = vmatmul.mubr.f32.gmra.mrb[0].mxu0 %v379
        %v516 = vpop.f32.mrb[0].mxu0
        %v517 = vadd.f32 %v443, %v516
        %v518 = vpop.f32.mrb[0].mxu0
        %519 = vmatprep.mubr.f32.mxu0 %v384
        %520 = vmatmul.mubr.f32.gmra.mrb[0].mxu0 %v380
        %v521 = vpop.f32.mrb[0].mxu0
        %v522 = vadd.f32 %v443, %v521
        %v523 = vpop.f32.mrb[0].mxu0
        %524 = vmatprep.mubr.f32.mxu0 %v385
        %525 = vmatmul.mubr.f32.gmra.mrb[0].mxu0 %v381
        %v526 = vpop.f32.mrb[0].mxu0
        %v527 = vadd.f32 %v443, %v526
        %v528 = vpop.f32.mrb[0].mxu0
        %529 = vdwg.mxu0
        %530 = vmatprep.subr.mxu0 0.0
        %531 = vmatpush1.msra.mxu0 %v422
        %532 = vmatprep.subr.mxu0 0.0
        %533 = vmatpush1.msra.mxu0 %v423
        %534 = vmatprep.subr.mxu0 0.0
        %535 = vmatpush1.msra.mxu0 %v424
        %536 = vmatprep.subr.mxu0 0.0
        %537 = vmatpush1.msra.mxu0 %v425
        %538 = vmatprep.subr.mxu0 0.0
        %539 = vmatpush1.msra.mxu0 %v426
        %540 = vmatprep.subr.mxu0 0.0
        %541 = vmatpush1.msra.mxu0 %v427
        %542 = vmatprep.subr.mxu0 0.0
        %543 = vmatpush1.msra.mxu0 %v428
        %544 = vmatprep.subr.mxu0 0.0
        %545 = vmatpush1.msra.mxu0 %v429
        %546 = vmatprep.subr.mxu0 0.0
        %547 = vmatpush1.msra.mxu0 %v430
        %548 = vmatprep.subr.mxu0 0.0
        %549 = vmatpush1.msra.mxu0 %v431
        %550 = vmatprep.subr.mxu0 0.0
        %551 = vmatpush1.msra.mxu0 %v432
        %552 = vmatprep.subr.mxu0 0.0
        %553 = vmatpush1.msra.mxu0 %v433
        %554 = vmatprep.subr.mxu0 0.0
        %555 = vmatpush1.msra.mxu0 %v434
        %556 = vmatprep.subr.mxu0 0.0
        %557 = vmatpush1.msra.mxu0 %v435
        %558 = vmatprep.subr.mxu0 0.0
        %559 = vmatpush1.msra.mxu0 %v436
        %560 = vmatprep.subr.mxu0 0.0
        %561 = vmatpush1.msra.mxu0 %v437
        %562 = vmatprep.subr.mxu0 0.0
        %563 = vmatpush1.msra.mxu0 0.0
        %564 = vmatprep.subr.mxu0 0.0
        %565 = vmatpush1.msra.mxu0 0.0
        %566 = vmatprep.subr.mxu0 0.0
        %567 = vmatpush1.msra.mxu0 0.0
        %568 = vmatprep.subr.mxu0 0.0
        %569 = vmatpush1.msra.mxu0 0.0
        %570 = vmatprep.subr.mxu0 0.0
        %571 = vmatpush1.msra.mxu0 0.0
        %572 = vmatprep.subr.mxu0 0.0
        %573 = vmatpush1.msra.mxu0 0.0
        %574 = vmatprep.subr.mxu0 0.0
        %575 = vmatpush1.msra.mxu0 0.0
        %576 = vmatprep.subr.mxu0 0.0
        %577 = vmatpush1.msra.mxu0 0.0
        %578 = vmatprep.subr.mxu0 0.0
        %579 = vmatpush1.msra.mxu0 0.0
        %580 = vmatprep.subr.mxu0 0.0
        %581 = vmatpush1.msra.mxu0 0.0
        %582 = vmatprep.subr.mxu0 0.0
        %583 = vmatpush1.msra.mxu0 0.0
        %584 = vmatprep.subr.mxu0 0.0
        %585 = vmatpush1.msra.mxu0 0.0
        %586 = vmatprep.subr.mxu0 0.0
        %587 = vmatpush1.msra.mxu0 0.0
        %588 = vmatprep.subr.mxu0 0.0
        %589 = vmatpush1.msra.mxu0 0.0
        %590 = vmatprep.subr.mxu0 0.0
        %591 = vmatpush1.msra.mxu0 0.0
        %592 = vmatprep.subr.mxu0 0.0
        %593 = vmatpush1.msra.mxu0 0.0
        %594 = vmatprep.mubr.f32.mxu0 0.0
        %595 = vmatmul.mubr.f32.gmra.mrb[0].mxu0 %v386
        %v596 = vpop.f32.mrb[0].mxu0
        %v597 = vadd.f32 %v512, %v596
        %v598 = vpop.f32.mrb[0].mxu0
        %599 = vmatprep.mubr.f32.mxu0 0.0
        %600 = vmatmul.mubr.f32.gmra.mrb[0].mxu0 %v387
        %v601 = vpop.f32.mrb[0].mxu0
        %v602 = vadd.f32 %v517, %v601
        %v603 = vpop.f32.mrb[0].mxu0
        %604 = vmatprep.mubr.f32.mxu0 0.0
        %605 = vmatmul.mubr.f32.gmra.mrb[0].mxu0 %v388
        %v606 = vpop.f32.mrb[0].mxu0
        %v607 = vadd.f32 %v522, %v606
        %v608 = vpop.f32.mrb[0].mxu0
        %609 = vmatprep.mubr.f32.mxu0 0.0
        %610 = vmatmul.mubr.f32.gmra.mrb[0].mxu0 %v389
        %v611 = vpop.f32.mrb[0].mxu0
        %v612 = vadd.f32 %v527, %v611
        %v613 = vpop.f32.mrb[0].mxu0
        %614 = vdwg.mxu0
        %v615 = vand.u32 2147483647, %v597
        %v616 = vand.u32 2147483647, %v602
        %v617 = vand.u32 2147483647, %v607
        %v618 = vand.u32 2147483647, %v612
        %v619 = vmul.f32 %v615, 0.23164189
        %v620 = vmul.f32 %v616, 0.23164189
        %v621 = vmul.f32 %v617, 0.23164189
        %v622 = vmul.f32 %v618, 0.23164189
        %v623 = vadd.f32 %v619, 1.0
        %v624 = vadd.f32 %v620, 1.0
        %v625 = vadd.f32 %v621, 1.0
        %v626 = vadd.f32 %v622, 1.0
        %v627 = vrcp.pop %v623
        %v628 = vrcp.pop %v624
        %v629 = vrcp.pop %v625
        %v630 = vrcp.pop %v626
        %v631 = vmul.f32 %v623, %v627
        %v632 = vmul.f32 %v624, %v628
        %v633 = vmul.f32 %v625, %v629
        %v634 = vmul.f32 %v626, %v630
        %v635 = vsub.f32 2.0, %v631
        %v636 = vsub.f32 2.0, %v632
        %v637 = vsub.f32 2.0, %v633
        %v638 = vsub.f32 2.0, %v634
        %v639 = vmul.f32 %v627, %v635
        %v640 = vmul.f32 %v628, %v636
        %v641 = vmul.f32 %v629, %v637
        %v642 = vmul.f32 %v630, %v638
        %v643 = vmul.f32 %v639, 1.0614054
        %v644 = vmul.f32 %v640, 1.0614054
        %v645 = vmul.f32 %v641, 1.0614054
        %v646 = vmul.f32 %v642, 1.0614054
        %v647 = vadd.f32 %v643, -1.4531521
        %v648 = vadd.f32 %v644, -1.4531521
        %v649 = vadd.f32 %v645, -1.4531521
        %v650 = vadd.f32 %v646, -1.4531521
        %v651 = vmul.f32 %v647, %v639
        %v652 = vmul.f32 %v648, %v640
        %v653 = vmul.f32 %v649, %v641
        %v654 = vmul.f32 %v650, %v642
        %v655 = vadd.f32 %v651, 1.4214138
        %v656 = vadd.f32 %v652, 1.4214138
        %v657 = vadd.f32 %v653, 1.4214138
        %v658 = vadd.f32 %v654, 1.4214138
        %v659 = vmul.f32 %v655, %v639
        %v660 = vmul.f32 %v656, %v640
        %v661 = vmul.f32 %v657, %v641
        %v662 = vmul.f32 %v658, %v642
        %v663 = vadd.f32 %v659, -0.28449672
        %v664 = vadd.f32 %v660, -0.28449672
        %v665 = vadd.f32 %v661, -0.28449672
        %v666 = vadd.f32 %v662, -0.28449672
        %v667 = vmul.f32 %v663, %v639
        %v668 = vmul.f32 %v664, %v640
        %v669 = vmul.f32 %v665, %v641
        %v670 = vmul.f32 %v666, %v642
        %v671 = vadd.f32 %v667, 0.2548296
        %v672 = vadd.f32 %v668, 0.2548296
        %v673 = vadd.f32 %v669, 0.2548296
        %v674 = vadd.f32 %v670, 0.2548296
        %v675 = vmul.f32 %v671, %v639
        %v676 = vmul.f32 %v672, %v640
        %v677 = vmul.f32 %v673, %v641
        %v678 = vmul.f32 %v674, %v642
        %v679 = vmul.f32 %v597, -0.5
        %v680 = vmul.f32 %v602, -0.5
        %v681 = vmul.f32 %v607, -0.5
        %v682 = vmul.f32 %v612, -0.5
        %v683 = vmul.f32 %v679, %v597
        %v684 = vmul.f32 %v680, %v602
        %v685 = vmul.f32 %v681, %v607
        %v686 = vmul.f32 %v682, %v612
        %v687 = vmul.f32 %v683, 1.442695
        %v688 = vpow.pop %v687
        %v689 = vmul.f32 %v684, 1.442695
        %v690 = vpow.pop %v689
        %v691 = vmul.f32 %v685, 1.442695
        %v692 = vpow.pop %v691
        %v693 = vmul.f32 %v686, 1.442695
        %v694 = vpow.pop %v693
        %v695 = vmul.f32 %v675, %v688
        %v696 = vmul.f32 %v676, %v690
        %v697 = vmul.f32 %v677, %v692
        %v698 = vmul.f32 %v678, %v694
        %v699 = vadd.f32 %v597, %v615
        %v700 = vadd.f32 %v602, %v616
        %v701 = vadd.f32 %v607, %v617
        %v702 = vadd.f32 %v612, %v618
        %v703 = vmul.f32 %v615, %v695
        %v704 = vmul.f32 %v616, %v696
        %v705 = vmul.f32 %v617, %v697
        %v706 = vmul.f32 %v618, %v698
        %v707 = vsub.f32 %v699, %v703
        %v708 = vsub.f32 %v700, %v704
        %v709 = vsub.f32 %v701, %v705
        %v710 = vsub.f32 %v702, %v706
        %v711 = vmul.f32 %v707, 0.5
        %v712 = vmul.f32 %v708, 0.5
        %v713 = vmul.f32 %v709, 0.5
        %v714 = vmul.f32 %v710, 0.5
        %715 = vst [vmem:[#allocation2] sm:$0xff] %v711
        %716 = vst [vmem:[#allocation2 + $0x8] sm:$0xff] %v712
        %717 = vst [vmem:[#allocation2 + $0x10] sm:$0xff] %v713
        %718 = vst [vmem:[#allocation2 + $0x18] sm:$0x3f] %v714
        %v719 = vld [vmem:[#allocation2] ss:$2 sm:$0xff]
        %s720 = scalar_lea.vmem [#allocation2], 16
        %v721 = vld [vmem:[%s720] ss:$2 sm:$0x3f]
        %v722 = vld [vmem:[#allocation10] sm:$0xff]
        %v723 = vld [vmem:[#allocation10 + $0x8] sm:$0xff]
        %v724 = vld [vmem:[#allocation10 + $0x10] sm:$0xff]
        %v725 = vld [vmem:[#allocation10 + $0x18] sm:$0xff]
        %v726 = vld [vmem:[#allocation10 + $0x20] sm:$0xff]
        %v727 = vld [vmem:[#allocation10 + $0x28] sm:$0xff]
        %v728 = vld [vmem:[#allocation10 + $0x30] sm:$0xff]
        %v729 = vld [vmem:[#allocation10 + $0x38] sm:$0xff]
        %v730 = vld [vmem:[#allocation10 + $0x40] sm:$0xff]
        %v731 = vld [vmem:[#allocation10 + $0x48] sm:$0xff]
        %v732 = vld [vmem:[#allocation10 + $0x50] sm:$0xff]
        %v733 = vld [vmem:[#allocation10 + $0x58] sm:$0xff]
        %v734 = vld [vmem:[#allocation10 + $0x60] sm:$0xff]
        %v735 = vld [vmem:[#allocation10 + $0x68] sm:$0xff]
        %v736 = vld [vmem:[#allocation10 + $0x70] sm:$0xff]
        %v737 = vld [vmem:[#allocation10 + $0x78] sm:$0xff]
        %s738 = scalar_lea.vmem [#allocation2], 1
        %v739 = vld [vmem:[%s738] ss:$2 sm:$0xff]
        %s740 = scalar_lea.vmem [#allocation2], 17
        %v741 = vld [vmem:[%s740] ss:$2 sm:$0x3f]
        %s742 = scalar_lea.vmem [#allocation10], 128
        %v743 = vld [vmem:[%s742] sm:$0xff]
        %v744 = vld [vmem:[%s742 + $0x8] sm:$0xff]
        %v745 = vld [vmem:[%s742 + $0x10] sm:$0xff]
        %v746 = vld [vmem:[%s742 + $0x18] sm:$0xff]
        %v747 = vld [vmem:[%s742 + $0x20] sm:$0xff]
        %v748 = vld [vmem:[%s742 + $0x28] sm:$0xff]
        %v749 = vld [vmem:[%s742 + $0x30] sm:$0xff]
        %v750 = vld [vmem:[%s742 + $0x38] sm:$0xff]
        %v751 = vld [vmem:[%s742 + $0x40] sm:$0xff]
        %v752 = vld [vmem:[%s742 + $0x48] sm:$0xff]
        %v753 = vld [vmem:[%s742 + $0x50] sm:$0xff]
        %v754 = vld [vmem:[%s742 + $0x58] sm:$0xff]
        %v755 = vld [vmem:[%s742 + $0x60] sm:$0xff]
        %v756 = vld [vmem:[%s742 + $0x68] sm:$0xff]
        %v757 = vld [vmem:[%s742 + $0x70] sm:$0xff]
        %v758 = vld [vmem:[%s742 + $0x78] sm:$0xff]
        %759 = vmatprep.subr.mxu0 0.0
        %760 = vmatpush1.msra.mxu0 %v743
        %761 = vmatprep.subr.mxu0 0.0
        %762 = vmatpush1.msra.mxu0 %v744
        %763 = vmatprep.subr.mxu0 0.0
        %764 = vmatpush1.msra.mxu0 %v745
        %765 = vmatprep.subr.mxu0 0.0
        %766 = vmatpush1.msra.mxu0 %v746
        %767 = vmatprep.subr.mxu0 0.0
        %768 = vmatpush1.msra.mxu0 %v747
        %769 = vmatprep.subr.mxu0 0.0
        %770 = vmatpush1.msra.mxu0 %v748
        %771 = vmatprep.subr.mxu0 0.0
        %772 = vmatpush1.msra.mxu0 %v749
        %773 = vmatprep.subr.mxu0 0.0
        %774 = vmatpush1.msra.mxu0 %v750
        %775 = vmatprep.subr.mxu0 0.0
        %776 = vmatpush1.msra.mxu0 %v751
        %777 = vmatprep.subr.mxu0 0.0
        %778 = vmatpush1.msra.mxu0 %v752
        %779 = vmatprep.subr.mxu0 0.0
        %780 = vmatpush1.msra.mxu0 %v753
        %781 = vmatprep.subr.mxu0 0.0
        %782 = vmatpush1.msra.mxu0 %v754
        %783 = vmatprep.subr.mxu0 0.0
        %784 = vmatpush1.msra.mxu0 %v755
        %785 = vmatprep.subr.mxu0 0.0
        %786 = vmatpush1.msra.mxu0 %v756
        %787 = vmatprep.subr.mxu0 0.0
        %788 = vmatpush1.msra.mxu0 %v757
        %789 = vmatprep.subr.mxu0 0.0
        %790 = vmatpush1.msra.mxu0 %v758
        %791 = vmatprep.subr.mxu0 0.0
        %792 = vmatpush1.msra.mxu0 0.0
        %793 = vmatprep.subr.mxu0 0.0
        %794 = vmatpush1.msra.mxu0 0.0
        %795 = vmatprep.subr.mxu0 0.0
        %796 = vmatpush1.msra.mxu0 0.0
        %797 = vmatprep.subr.mxu0 0.0
        %798 = vmatpush1.msra.mxu0 0.0
        %799 = vmatprep.subr.mxu0 0.0
        %800 = vmatpush1.msra.mxu0 0.0
        %801 = vmatprep.subr.mxu0 0.0
        %802 = vmatpush1.msra.mxu0 0.0
        %803 = vmatprep.subr.mxu0 0.0
        %804 = vmatpush1.msra.mxu0 0.0
        %805 = vmatprep.subr.mxu0 0.0
        %806 = vmatpush1.msra.mxu0 0.0
        %807 = vmatprep.subr.mxu0 0.0
        %808 = vmatpush1.msra.mxu0 0.0
        %809 = vmatprep.subr.mxu0 0.0
        %810 = vmatpush1.msra.mxu0 0.0
        %811 = vmatprep.subr.mxu0 0.0
        %812 = vmatpush1.msra.mxu0 0.0
        %813 = vmatprep.subr.mxu0 0.0
        %814 = vmatpush1.msra.mxu0 0.0
        %815 = vmatprep.subr.mxu0 0.0
        %816 = vmatpush1.msra.mxu0 0.0
        %817 = vmatprep.subr.mxu0 0.0
        %818 = vmatpush1.msra.mxu0 0.0
        %819 = vmatprep.subr.mxu0 0.0
        %820 = vmatpush1.msra.mxu0 0.0
        %821 = vmatprep.subr.mxu0 0.0
        %822 = vmatpush1.msra.mxu0 0.0
        %823 = vmatprep.mubr.f32.mxu0 0.0
        %824 = vmatmul.mubr.f32.gmra.mrb[0].mxu0 %v739
        %v825 = vpop.f32.mrb[0].mxu0
        %v826 = vadd.f32 0.0, %v825
        %v827 = vpop.f32.mrb[0].mxu0
        %828 = vmatprep.mubr.f32.mxu0 0.0
        %829 = vmatmul.mubr.f32.gmra.mrb[0].mxu0 %v741
        %v830 = vpop.f32.mrb[0].mxu0
        %v831 = vadd.f32 0.0, %v830
        %v832 = vpop.f32.mrb[0].mxu0
        %833 = vdwg.mxu0
        %834 = vmatprep.subr.mxu0 0.0
        %835 = vmatpush1.msra.mxu0 %v722
        %836 = vmatprep.subr.mxu0 0.0
        %837 = vmatpush1.msra.mxu0 %v723
        %838 = vmatprep.subr.mxu0 0.0
        %839 = vmatpush1.msra.mxu0 %v724
        %840 = vmatprep.subr.mxu0 0.0
        %841 = vmatpush1.msra.mxu0 %v725
        %842 = vmatprep.subr.mxu0 0.0
        %843 = vmatpush1.msra.mxu0 %v726
        %844 = vmatprep.subr.mxu0 0.0
        %845 = vmatpush1.msra.mxu0 %v727
        %846 = vmatprep.subr.mxu0 0.0
        %847 = vmatpush1.msra.mxu0 %v728
        %848 = vmatprep.subr.mxu0 0.0
        %849 = vmatpush1.msra.mxu0 %v729
        %850 = vmatprep.subr.mxu0 0.0
        %851 = vmatpush1.msra.mxu0 %v730
        %852 = vmatprep.subr.mxu0 0.0
        %853 = vmatpush1.msra.mxu0 %v731
        %854 = vmatprep.subr.mxu0 0.0
        %855 = vmatpush1.msra.mxu0 %v732
        %856 = vmatprep.subr.mxu0 0.0
        %857 = vmatpush1.msra.mxu0 %v733
        %858 = vmatprep.subr.mxu0 0.0
        %859 = vmatpush1.msra.mxu0 %v734
        %860 = vmatprep.subr.mxu0 0.0
        %861 = vmatpush1.msra.mxu0 %v735
        %862 = vmatprep.subr.mxu0 0.0
        %863 = vmatpush1.msra.mxu0 %v736
        %864 = vmatprep.subr.mxu0 0.0
        %865 = vmatpush1.msra.mxu0 %v737
        %866 = vmatprep.subr.mxu0 0.0
        %867 = vmatpush1.msra.mxu0 0.0
        %868 = vmatprep.subr.mxu0 0.0
        %869 = vmatpush1.msra.mxu0 0.0
        %870 = vmatprep.subr.mxu0 0.0
        %871 = vmatpush1.msra.mxu0 0.0
        %872 = vmatprep.subr.mxu0 0.0
        %873 = vmatpush1.msra.mxu0 0.0
        %874 = vmatprep.subr.mxu0 0.0
        %875 = vmatpush1.msra.mxu0 0.0
        %876 = vmatprep.subr.mxu0 0.0
        %877 = vmatpush1.msra.mxu0 0.0
        %878 = vmatprep.subr.mxu0 0.0
        %879 = vmatpush1.msra.mxu0 0.0
        %880 = vmatprep.subr.mxu0 0.0
        %881 = vmatpush1.msra.mxu0 0.0
        %882 = vmatprep.subr.mxu0 0.0
        %883 = vmatpush1.msra.mxu0 0.0
        %884 = vmatprep.subr.mxu0 0.0
        %885 = vmatpush1.msra.mxu0 0.0
        %886 = vmatprep.subr.mxu0 0.0
        %887 = vmatpush1.msra.mxu0 0.0
        %888 = vmatprep.subr.mxu0 0.0
        %889 = vmatpush1.msra.mxu0 0.0
        %890 = vmatprep.subr.mxu0 0.0
        %891 = vmatpush1.msra.mxu0 0.0
        %892 = vmatprep.subr.mxu0 0.0
        %893 = vmatpush1.msra.mxu0 0.0
        %894 = vmatprep.subr.mxu0 0.0
        %895 = vmatpush1.msra.mxu0 0.0
        %896 = vmatprep.subr.mxu0 0.0
        %897 = vmatpush1.msra.mxu0 0.0
        %898 = vmatprep.mubr.f32.mxu0 0.0
        %899 = vmatmul.mubr.f32.gmra.mrb[0].mxu0 %v719
        %v900 = vpop.f32.mrb[0].mxu0
        %v901 = vadd.f32 %v826, %v900
        %v902 = vpop.f32.mrb[0].mxu0
        %903 = vmatprep.mubr.f32.mxu0 0.0
        %904 = vmatmul.mubr.f32.gmra.mrb[0].mxu0 %v721
        %v905 = vpop.f32.mrb[0].mxu0
        %v906 = vadd.f32 %v831, %v905
        %v907 = vpop.f32.mrb[0].mxu0
        %908 = vdwg.mxu0
        %s909 = scalar_lea.vmem [#allocation2], 2
        %v910 = vld [vmem:[%s909] ss:$2 sm:$0xff]
        %s911 = scalar_lea.vmem [#allocation2], 18
        %v912 = vld [vmem:[%s911] ss:$2 sm:$0x3f]
        %s913 = scalar_lea.vmem [#allocation10], 256
        %v914 = vld [vmem:[%s913] sm:$0xff]
        %v915 = vld [vmem:[%s913 + $0x8] sm:$0xff]
        %v916 = vld [vmem:[%s913 + $0x10] sm:$0xff]
        %v917 = vld [vmem:[%s913 + $0x18] sm:$0xff]
        %v918 = vld [vmem:[%s913 + $0x20] sm:$0xff]
        %v919 = vld [vmem:[%s913 + $0x28] sm:$0xff]
        %v920 = vld [vmem:[%s913 + $0x30] sm:$0xff]
        %v921 = vld [vmem:[%s913 + $0x38] sm:$0xff]
        %v922 = vld [vmem:[%s913 + $0x40] sm:$0xff]
        %v923 = vld [vmem:[%s913 + $0x48] sm:$0xff]
        %v924 = vld [vmem:[%s913 + $0x50] sm:$0xff]
        %v925 = vld [vmem:[%s913 + $0x58] sm:$0xff]
        %v926 = vld [vmem:[%s913 + $0x60] sm:$0xff]
        %v927 = vld [vmem:[%s913 + $0x68] sm:$0xff]
        %v928 = vld [vmem:[%s913 + $0x70] sm:$0xff]
        %v929 = vld [vmem:[%s913 + $0x78] sm:$0xff]
        %930 = vmatprep.subr.mxu0 0.0
        %931 = vmatpush1.msra.mxu0 %v914
        %932 = vmatprep.subr.mxu0 0.0
        %933 = vmatpush1.msra.mxu0 %v915
        %934 = vmatprep.subr.mxu0 0.0
        %935 = vmatpush1.msra.mxu0 %v916
        %936 = vmatprep.subr.mxu0 0.0
        %937 = vmatpush1.msra.mxu0 %v917
        %938 = vmatprep.subr.mxu0 0.0
        %939 = vmatpush1.msra.mxu0 %v918
        %940 = vmatprep.subr.mxu0 0.0
        %941 = vmatpush1.msra.mxu0 %v919
        %942 = vmatprep.subr.mxu0 0.0
        %943 = vmatpush1.msra.mxu0 %v920
        %944 = vmatprep.subr.mxu0 0.0
        %945 = vmatpush1.msra.mxu0 %v921
        %946 = vmatprep.subr.mxu0 0.0
        %947 = vmatpush1.msra.mxu0 %v922
        %948 = vmatprep.subr.mxu0 0.0
        %949 = vmatpush1.msra.mxu0 %v923
        %950 = vmatprep.subr.mxu0 0.0
        %951 = vmatpush1.msra.mxu0 %v924
        %952 = vmatprep.subr.mxu0 0.0
        %953 = vmatpush1.msra.mxu0 %v925
        %954 = vmatprep.subr.mxu0 0.0
        %955 = vmatpush1.msra.mxu0 %v926
        %956 = vmatprep.subr.mxu0 0.0
        %957 = vmatpush1.msra.mxu0 %v927
        %958 = vmatprep.subr.mxu0 0.0
        %959 = vmatpush1.msra.mxu0 %v928
        %960 = vmatprep.subr.mxu0 0.0
        %961 = vmatpush1.msra.mxu0 %v929
        %962 = vmatprep.subr.mxu0 0.0
        %963 = vmatpush1.msra.mxu0 0.0
        %964 = vmatprep.subr.mxu0 0.0
        %965 = vmatpush1.msra.mxu0 0.0
        %966 = vmatprep.subr.mxu0 0.0
        %967 = vmatpush1.msra.mxu0 0.0
        %968 = vmatprep.subr.mxu0 0.0
        %969 = vmatpush1.msra.mxu0 0.0
        %970 = vmatprep.subr.mxu0 0.0
        %971 = vmatpush1.msra.mxu0 0.0
        %972 = vmatprep.subr.mxu0 0.0
        %973 = vmatpush1.msra.mxu0 0.0
        %974 = vmatprep.subr.mxu0 0.0
        %975 = vmatpush1.msra.mxu0 0.0
        %976 = vmatprep.subr.mxu0 0.0
        %977 = vmatpush1.msra.mxu0 0.0
        %978 = vmatprep.subr.mxu0 0.0
        %979 = vmatpush1.msra.mxu0 0.0
        %980 = vmatprep.subr.mxu0 0.0
        %981 = vmatpush1.msra.mxu0 0.0
        %982 = vmatprep.subr.mxu0 0.0
        %983 = vmatpush1.msra.mxu0 0.0
        %984 = vmatprep.subr.mxu0 0.0
        %985 = vmatpush1.msra.mxu0 0.0
        %986 = vmatprep.subr.mxu0 0.0
        %987 = vmatpush1.msra.mxu0 0.0
        %988 = vmatprep.subr.mxu0 0.0
        %989 = vmatpush1.msra.mxu0 0.0
        %990 = vmatprep.subr.mxu0 0.0
        %991 = vmatpush1.msra.mxu0 0.0
        %992 = vmatprep.subr.mxu0 0.0
        %993 = vmatpush1.msra.mxu0 0.0
        %994 = vmatprep.mubr.f32.mxu0 0.0
        %995 = vmatmul.mubr.f32.gmra.mrb[0].mxu0 %v910
        %v996 = vpop.f32.mrb[0].mxu0
        %v997 = vadd.f32 0.0, %v996
        %v998 = vpop.f32.mrb[0].mxu0
        %999 = vmatprep.mubr.f32.mxu0 0.0
        %1000 = vmatmul.mubr.f32.gmra.mrb[0].mxu0 %v912
        %v1001 = vpop.f32.mrb[0].mxu0
        %v1002 = vadd.f32 0.0, %v1001
        %v1003 = vpop.f32.mrb[0].mxu0
        %1004 = vdwg.mxu0
        %v1005 = vadd.f32 %v901, %v997
        %v1006 = vadd.f32 %v906, %v1002
        %v1007 = vld [vmem:[#allocation12] sm:$0x1]
        %v1009 = vlaneseq
        %v1010 = vshrl.u32 %v1009, 7
        %v1011 = vsub.s32 0, %v1010
        %v1012 = vrot.slane %v1007, %v1011
        %v1014 = vadd.f32 %v1005, %v1012
        %v1015 = vadd.f32 %v1006, %v1012
        %v1016 = vand.u32 2147483647, %v1014
        %v1017 = vand.u32 2147483647, %v1015
        %v1018 = vmul.f32 %v1016, 0.23164189
        %v1019 = vmul.f32 %v1017, 0.23164189
        %v1020 = vadd.f32 %v1018, 1.0
        %v1021 = vadd.f32 %v1019, 1.0
        %v1022 = vrcp.pop %v1020
        %v1023 = vrcp.pop %v1021
        %v1024 = vmul.f32 %v1020, %v1022
        %v1025 = vmul.f32 %v1021, %v1023
        %v1026 = vsub.f32 2.0, %v1024
        %v1027 = vsub.f32 2.0, %v1025
        %v1028 = vmul.f32 %v1022, %v1026
        %v1029 = vmul.f32 %v1023, %v1027
        %v1030 = vmul.f32 %v1028, 1.0614054
        %v1031 = vmul.f32 %v1029, 1.0614054
        %v1032 = vadd.f32 %v1030, -1.4531521
        %v1033 = vadd.f32 %v1031, -1.4531521
        %v1034 = vmul.f32 %v1032, %v1028
        %v1035 = vmul.f32 %v1033, %v1029
        %v1036 = vadd.f32 %v1034, 1.4214138
        %v1037 = vadd.f32 %v1035, 1.4214138
        %v1038 = vmul.f32 %v1036, %v1028
        %v1039 = vmul.f32 %v1037, %v1029
        %v1040 = vadd.f32 %v1038, -0.28449672
        %v1041 = vadd.f32 %v1039, -0.28449672
        %v1042 = vmul.f32 %v1040, %v1028
        %v1043 = vmul.f32 %v1041, %v1029
        %v1044 = vadd.f32 %v1042, 0.2548296
        %v1045 = vadd.f32 %v1043, 0.2548296
        %v1046 = vmul.f32 %v1044, %v1028
        %v1047 = vmul.f32 %v1045, %v1029
        %v1048 = vmul.f32 %v1014, -0.5
        %v1049 = vmul.f32 %v1015, -0.5
        %v1050 = vmul.f32 %v1048, %v1014
        %v1051 = vmul.f32 %v1049, %v1015
        %v1052 = vmul.f32 %v1050, 1.442695
        %v1053 = vpow.pop %v1052
        %v1054 = vmul.f32 %v1051, 1.442695
        %v1055 = vpow.pop %v1054
        %v1056 = vmul.f32 %v1046, %v1053
        %v1057 = vmul.f32 %v1047, %v1055
        %v1058 = vadd.f32 %v1014, %v1016
        %v1059 = vadd.f32 %v1015, %v1017
        %v1060 = vmul.f32 %v1016, %v1056
        %v1061 = vmul.f32 %v1017, %v1057
        %v1062 = vsub.f32 %v1058, %v1060
        %v1063 = vsub.f32 %v1059, %v1061
        %v1064 = vmul.f32 %v1062, 0.5
        %v1065 = vmul.f32 %v1063, 0.5
        %1066 = vst [vmem:[#allocation3] sm:$0xff] %v1064
        %1067 = vst [vmem:[#allocation3 + $0x8] sm:$0x3f] %v1065
        %v1068 = vld [vmem:[#allocation3] ss:$3 sm:$0xf]
        %v1069 = vld [vmem:[#allocation13] sm:$0xff]
        %v1070 = vld [vmem:[#allocation13 + $0x8] sm:$0xff]
        %v1071 = vld [vmem:[#allocation13 + $0x10] sm:$0xff]
        %v1072 = vld [vmem:[#allocation13 + $0x18] sm:$0xff]
        %v1073 = vld [vmem:[#allocation13 + $0x20] sm:$0xff]
        %v1074 = vld [vmem:[#allocation13 + $0x28] sm:$0xff]
        %v1075 = vld [vmem:[#allocation13 + $0x30] sm:$0xff]
        %v1076 = vld [vmem:[#allocation13 + $0x38] sm:$0xff]
        %v1077 = vld [vmem:[#allocation13 + $0x40] sm:$0xff]
        %v1078 = vld [vmem:[#allocation13 + $0x48] sm:$0xff]
        %v1079 = vld [vmem:[#allocation13 + $0x50] sm:$0xff]
        %v1080 = vld [vmem:[#allocation13 + $0x58] sm:$0xff]
        %v1081 = vld [vmem:[#allocation13 + $0x60] sm:$0xff]
        %v1082 = vld [vmem:[#allocation13 + $0x68] sm:$0xff]
        %v1083 = vld [vmem:[#allocation13 + $0x70] sm:$0xff]
        %v1084 = vld [vmem:[#allocation13 + $0x78] sm:$0xff]
        %s1085 = scalar_lea.vmem [#allocation3], 1
        %v1086 = vld [vmem:[%s1085] ss:$3 sm:$0xf]
        %s1087 = scalar_lea.vmem [#allocation13], 128
        %v1088 = vld [vmem:[%s1087] sm:$0xff]
        %v1089 = vld [vmem:[%s1087 + $0x8] sm:$0xff]
        %v1090 = vld [vmem:[%s1087 + $0x10] sm:$0xff]
        %v1091 = vld [vmem:[%s1087 + $0x18] sm:$0xff]
        %v1092 = vld [vmem:[%s1087 + $0x20] sm:$0xff]
        %v1093 = vld [vmem:[%s1087 + $0x28] sm:$0xff]
        %v1094 = vld [vmem:[%s1087 + $0x30] sm:$0xff]
        %v1095 = vld [vmem:[%s1087 + $0x38] sm:$0xff]
        %v1096 = vld [vmem:[%s1087 + $0x40] sm:$0xff]
        %v1097 = vld [vmem:[%s1087 + $0x48] sm:$0xff]
        %v1098 = vld [vmem:[%s1087 + $0x50] sm:$0xff]
        %v1099 = vld [vmem:[%s1087 + $0x58] sm:$0xff]
        %v1100 = vld [vmem:[%s1087 + $0x60] sm:$0xff]
        %v1101 = vld [vmem:[%s1087 + $0x68] sm:$0xff]
        %v1102 = vld [vmem:[%s1087 + $0x70] sm:$0xff]
        %v1103 = vld [vmem:[%s1087 + $0x78] sm:$0xff]
        %1104 = vmatprep.subr.mxu0 0.0
        %1105 = vmatpush1.msra.mxu0 %v1088
        %1106 = vmatprep.subr.mxu0 0.0
        %1107 = vmatpush1.msra.mxu0 %v1089
        %1108 = vmatprep.subr.mxu0 0.0
        %1109 = vmatpush1.msra.mxu0 %v1090
        %1110 = vmatprep.subr.mxu0 0.0
        %1111 = vmatpush1.msra.mxu0 %v1091
        %1112 = vmatprep.subr.mxu0 0.0
        %1113 = vmatpush1.msra.mxu0 %v1092
        %1114 = vmatprep.subr.mxu0 0.0
        %1115 = vmatpush1.msra.mxu0 %v1093
        %1116 = vmatprep.subr.mxu0 0.0
        %1117 = vmatpush1.msra.mxu0 %v1094
        %1118 = vmatprep.subr.mxu0 0.0
        %1119 = vmatpush1.msra.mxu0 %v1095
        %1120 = vmatprep.subr.mxu0 0.0
        %1121 = vmatpush1.msra.mxu0 %v1096
        %1122 = vmatprep.subr.mxu0 0.0
        %1123 = vmatpush1.msra.mxu0 %v1097
        %1124 = vmatprep.subr.mxu0 0.0
        %1125 = vmatpush1.msra.mxu0 %v1098
        %1126 = vmatprep.subr.mxu0 0.0
        %1127 = vmatpush1.msra.mxu0 %v1099
        %1128 = vmatprep.subr.mxu0 0.0
        %1129 = vmatpush1.msra.mxu0 %v1100
        %1130 = vmatprep.subr.mxu0 0.0
        %1131 = vmatpush1.msra.mxu0 %v1101
        %1132 = vmatprep.subr.mxu0 0.0
        %1133 = vmatpush1.msra.mxu0 %v1102
        %1134 = vmatprep.subr.mxu0 0.0
        %1135 = vmatpush1.msra.mxu0 %v1103
        %1136 = vmatprep.subr.mxu0 0.0
        %1137 = vmatpush1.msra.mxu0 0.0
        %1138 = vmatprep.subr.mxu0 0.0
        %1139 = vmatpush1.msra.mxu0 0.0
        %1140 = vmatprep.subr.mxu0 0.0
        %1141 = vmatpush1.msra.mxu0 0.0
        %1142 = vmatprep.subr.mxu0 0.0
        %1143 = vmatpush1.msra.mxu0 0.0
        %1144 = vmatprep.subr.mxu0 0.0
        %1145 = vmatpush1.msra.mxu0 0.0
        %1146 = vmatprep.subr.mxu0 0.0
        %1147 = vmatpush1.msra.mxu0 0.0
        %1148 = vmatprep.subr.mxu0 0.0
        %1149 = vmatpush1.msra.mxu0 0.0
        %1150 = vmatprep.subr.mxu0 0.0
        %1151 = vmatpush1.msra.mxu0 0.0
        %1152 = vmatprep.subr.mxu0 0.0
        %1153 = vmatpush1.msra.mxu0 0.0
        %1154 = vmatprep.subr.mxu0 0.0
        %1155 = vmatpush1.msra.mxu0 0.0
        %1156 = vmatprep.subr.mxu0 0.0
        %1157 = vmatpush1.msra.mxu0 0.0
        %1158 = vmatprep.subr.mxu0 0.0
        %1159 = vmatpush1.msra.mxu0 0.0
        %1160 = vmatprep.subr.mxu0 0.0
        %1161 = vmatpush1.msra.mxu0 0.0
        %1162 = vmatprep.subr.mxu0 0.0
        %1163 = vmatpush1.msra.mxu0 0.0
        %1164 = vmatprep.subr.mxu0 0.0
        %1165 = vmatpush1.msra.mxu0 0.0
        %1166 = vmatprep.subr.mxu0 0.0
        %1167 = vmatpush1.msra.mxu0 0.0
        %1168 = vmatprep.mubr.f32.mxu0 0.0
        %1169 = vmatmul.mubr.f32.gmra.mrb[0].mxu0 %v1086
        %v1170 = vpop.f32.mrb[0].mxu0
        %v1171 = vadd.f32 0.0, %v1170
        %v1172 = vpop.f32.mrb[0].mxu0
        %1173 = vdwg.mxu0
        %1174 = vmatprep.subr.mxu0 0.0
        %1175 = vmatpush1.msra.mxu0 %v1069
        %1176 = vmatprep.subr.mxu0 0.0
        %1177 = vmatpush1.msra.mxu0 %v1070
        %1178 = vmatprep.subr.mxu0 0.0
        %1179 = vmatpush1.msra.mxu0 %v1071
        %1180 = vmatprep.subr.mxu0 0.0
        %1181 = vmatpush1.msra.mxu0 %v1072
        %1182 = vmatprep.subr.mxu0 0.0
        %1183 = vmatpush1.msra.mxu0 %v1073
        %1184 = vmatprep.subr.mxu0 0.0
        %1185 = vmatpush1.msra.mxu0 %v1074
        %1186 = vmatprep.subr.mxu0 0.0
        %1187 = vmatpush1.msra.mxu0 %v1075
        %1188 = vmatprep.subr.mxu0 0.0
        %1189 = vmatpush1.msra.mxu0 %v1076
        %1190 = vmatprep.subr.mxu0 0.0
        %1191 = vmatpush1.msra.mxu0 %v1077
        %1192 = vmatprep.subr.mxu0 0.0
        %1193 = vmatpush1.msra.mxu0 %v1078
        %1194 = vmatprep.subr.mxu0 0.0
        %1195 = vmatpush1.msra.mxu0 %v1079
        %1196 = vmatprep.subr.mxu0 0.0
        %1197 = vmatpush1.msra.mxu0 %v1080
        %1198 = vmatprep.subr.mxu0 0.0
        %1199 = vmatpush1.msra.mxu0 %v1081
        %1200 = vmatprep.subr.mxu0 0.0
        %1201 = vmatpush1.msra.mxu0 %v1082
        %1202 = vmatprep.subr.mxu0 0.0
        %1203 = vmatpush1.msra.mxu0 %v1083
        %1204 = vmatprep.subr.mxu0 0.0
        %1205 = vmatpush1.msra.mxu0 %v1084
        %1206 = vmatprep.subr.mxu0 0.0
        %1207 = vmatpush1.msra.mxu0 0.0
        %1208 = vmatprep.subr.mxu0 0.0
        %1209 = vmatpush1.msra.mxu0 0.0
        %1210 = vmatprep.subr.mxu0 0.0
        %1211 = vmatpush1.msra.mxu0 0.0
        %1212 = vmatprep.subr.mxu0 0.0
        %1213 = vmatpush1.msra.mxu0 0.0
        %1214 = vmatprep.subr.mxu0 0.0
        %1215 = vmatpush1.msra.mxu0 0.0
        %1216 = vmatprep.subr.mxu0 0.0
        %1217 = vmatpush1.msra.mxu0 0.0
        %1218 = vmatprep.subr.mxu0 0.0
        %1219 = vmatpush1.msra.mxu0 0.0
        %1220 = vmatprep.subr.mxu0 0.0
        %1221 = vmatpush1.msra.mxu0 0.0
        %1222 = vmatprep.subr.mxu0 0.0
        %1223 = vmatpush1.msra.mxu0 0.0
        %1224 = vmatprep.subr.mxu0 0.0
        %1225 = vmatpush1.msra.mxu0 0.0
        %1226 = vmatprep.subr.mxu0 0.0
        %1227 = vmatpush1.msra.mxu0 0.0
        %1228 = vmatprep.subr.mxu0 0.0
        %1229 = vmatpush1.msra.mxu0 0.0
        %1230 = vmatprep.subr.mxu0 0.0
        %1231 = vmatpush1.msra.mxu0 0.0
        %1232 = vmatprep.subr.mxu0 0.0
        %1233 = vmatpush1.msra.mxu0 0.0
        %1234 = vmatprep.subr.mxu0 0.0
        %1235 = vmatpush1.msra.mxu0 0.0
        %1236 = vmatprep.subr.mxu0 0.0
        %1237 = vmatpush1.msra.mxu0 0.0
        %1238 = vmatprep.mubr.f32.mxu0 0.0
        %1239 = vmatmul.mubr.f32.gmra.mrb[0].mxu0 %v1068
        %v1240 = vpop.f32.mrb[0].mxu0
        %v1241 = vadd.f32 %v1171, %v1240
        %v1242 = vpop.f32.mrb[0].mxu0
        %1243 = vdwg.mxu0
        %s1244 = scalar_lea.vmem [#allocation3], 2
        %v1245 = vld [vmem:[%s1244] ss:$3 sm:$0xf]
        %s1246 = scalar_lea.vmem [#allocation13], 256
        %v1247 = vld [vmem:[%s1246] sm:$0xff]
        %v1248 = vld [vmem:[%s1246 + $0x8] sm:$0xff]
        %v1249 = vld [vmem:[%s1246 + $0x10] sm:$0xff]
        %v1250 = vld [vmem:[%s1246 + $0x18] sm:$0xff]
        %v1251 = vld [vmem:[%s1246 + $0x20] sm:$0xff]
        %v1252 = vld [vmem:[%s1246 + $0x28] sm:$0xff]
        %v1253 = vld [vmem:[%s1246 + $0x30] sm:$0xff]
        %v1254 = vld [vmem:[%s1246 + $0x38] sm:$0xff]
        %v1255 = vld [vmem:[%s1246 + $0x40] sm:$0xff]
        %v1256 = vld [vmem:[%s1246 + $0x48] sm:$0xff]
        %v1257 = vld [vmem:[%s1246 + $0x50] sm:$0xff]
        %v1258 = vld [vmem:[%s1246 + $0x58] sm:$0xff]
        %v1259 = vld [vmem:[%s1246 + $0x60] sm:$0xff]
        %v1260 = vld [vmem:[%s1246 + $0x68] sm:$0xff]
        %v1261 = vld [vmem:[%s1246 + $0x70] sm:$0xff]
        %v1262 = vld [vmem:[%s1246 + $0x78] sm:$0xff]
        %1263 = vmatprep.subr.mxu0 0.0
        %1264 = vmatpush1.msra.mxu0 %v1247
        %1265 = vmatprep.subr.mxu0 0.0
        %1266 = vmatpush1.msra.mxu0 %v1248
        %1267 = vmatprep.subr.mxu0 0.0
        %1268 = vmatpush1.msra.mxu0 %v1249
        %1269 = vmatprep.subr.mxu0 0.0
        %1270 = vmatpush1.msra.mxu0 %v1250
        %1271 = vmatprep.subr.mxu0 0.0
        %1272 = vmatpush1.msra.mxu0 %v1251
        %1273 = vmatprep.subr.mxu0 0.0
        %1274 = vmatpush1.msra.mxu0 %v1252
        %1275 = vmatprep.subr.mxu0 0.0
        %1276 = vmatpush1.msra.mxu0 %v1253
        %1277 = vmatprep.subr.mxu0 0.0
        %1278 = vmatpush1.msra.mxu0 %v1254
        %1279 = vmatprep.subr.mxu0 0.0
        %1280 = vmatpush1.msra.mxu0 %v1255
        %1281 = vmatprep.subr.mxu0 0.0
        %1282 = vmatpush1.msra.mxu0 %v1256
        %1283 = vmatprep.subr.mxu0 0.0
        %1284 = vmatpush1.msra.mxu0 %v1257
        %1285 = vmatprep.subr.mxu0 0.0
        %1286 = vmatpush1.msra.mxu0 %v1258
        %1287 = vmatprep.subr.mxu0 0.0
        %1288 = vmatpush1.msra.mxu0 %v1259
        %1289 = vmatprep.subr.mxu0 0.0
        %1290 = vmatpush1.msra.mxu0 %v1260
        %1291 = vmatprep.subr.mxu0 0.0
        %1292 = vmatpush1.msra.mxu0 %v1261
        %1293 = vmatprep.subr.mxu0 0.0
        %1294 = vmatpush1.msra.mxu0 %v1262
        %1295 = vmatprep.subr.mxu0 0.0
        %1296 = vmatpush1.msra.mxu0 0.0
        %1297 = vmatprep.subr.mxu0 0.0
        %1298 = vmatpush1.msra.mxu0 0.0
        %1299 = vmatprep.subr.mxu0 0.0
        %1300 = vmatpush1.msra.mxu0 0.0
        %1301 = vmatprep.subr.mxu0 0.0
        %1302 = vmatpush1.msra.mxu0 0.0
        %1303 = vmatprep.subr.mxu0 0.0
        %1304 = vmatpush1.msra.mxu0 0.0
        %1305 = vmatprep.subr.mxu0 0.0
        %1306 = vmatpush1.msra.mxu0 0.0
        %1307 = vmatprep.subr.mxu0 0.0
        %1308 = vmatpush1.msra.mxu0 0.0
        %1309 = vmatprep.subr.mxu0 0.0
        %1310 = vmatpush1.msra.mxu0 0.0
        %1311 = vmatprep.subr.mxu0 0.0
        %1312 = vmatpush1.msra.mxu0 0.0
        %1313 = vmatprep.subr.mxu0 0.0
        %1314 = vmatpush1.msra.mxu0 0.0
        %1315 = vmatprep.subr.mxu0 0.0
        %1316 = vmatpush1.msra.mxu0 0.0
        %1317 = vmatprep.subr.mxu0 0.0
        %1318 = vmatpush1.msra.mxu0 0.0
        %1319 = vmatprep.subr.mxu0 0.0
        %1320 = vmatpush1.msra.mxu0 0.0
        %1321 = vmatprep.subr.mxu0 0.0
        %1322 = vmatpush1.msra.mxu0 0.0
        %1323 = vmatprep.subr.mxu0 0.0
        %1324 = vmatpush1.msra.mxu0 0.0
        %1325 = vmatprep.subr.mxu0 0.0
        %1326 = vmatpush1.msra.mxu0 0.0
        %1327 = vmatprep.mubr.f32.mxu0 0.0
        %1328 = vmatmul.mubr.f32.gmra.mrb[0].mxu0 %v1245
        %v1329 = vpop.f32.mrb[0].mxu0
        %v1330 = vadd.f32 0.0, %v1329
        %v1331 = vpop.f32.mrb[0].mxu0
        %1332 = vdwg.mxu0
        %v1333 = vadd.f32 %v1241, %v1330
        %v1334 = vld [vmem:[#allocation15] sm:$0x1]
        %v1336 = vlaneseq
        %v1337 = vshrl.u32 %v1336, 7
        %v1338 = vsub.s32 0, %v1337
        %v1339 = vrot.slane %v1334, %v1338
        %v1341 = vadd.f32 %v1333, %v1339
        %v1342 = vand.u32 2147483647, %v1341
        %v1343 = vmul.f32 %v1342, 0.23164189
        %v1344 = vadd.f32 %v1343, 1.0
        %v1345 = vrcp.pop %v1344
        %v1346 = vmul.f32 %v1344, %v1345
        %v1347 = vsub.f32 2.0, %v1346
        %v1348 = vmul.f32 %v1345, %v1347
        %v1349 = vmul.f32 %v1348, 1.0614054
        %v1350 = vadd.f32 %v1349, -1.4531521
        %v1351 = vmul.f32 %v1350, %v1348
        %v1352 = vadd.f32 %v1351, 1.4214138
        %v1353 = vmul.f32 %v1352, %v1348
        %v1354 = vadd.f32 %v1353, -0.28449672
        %v1355 = vmul.f32 %v1354, %v1348
        %v1356 = vadd.f32 %v1355, 0.2548296
        %v1357 = vmul.f32 %v1356, %v1348
        %v1358 = vmul.f32 %v1341, -0.5
        %v1359 = vmul.f32 %v1358, %v1341
        %v1360 = vmul.f32 %v1359, 1.442695
        %v1361 = vpow.pop %v1360
        %v1362 = vmul.f32 %v1357, %v1361
        %v1363 = vadd.f32 %v1341, %v1342
        %v1364 = vmul.f32 %v1342, %v1362
        %v1365 = vsub.f32 %v1363, %v1364
        %v1366 = vmul.f32 %v1365, 0.5
        %1367 = vst [vmem:[%s377] sm:$0xf] %v1366
        %s1368 = sand.u32 %s187, 1
        %s1369 = scalar_lea.sflag [#allocation6], %s1368
        %s1370 = sand.u32 %s187, 1
        %s1371 = smul.addr %s1370, 4
        %s1372 = scalar_lea.vmem [#allocation16], %s1371
        // Predicated region
        $region77: #{aslp_conv1d_subsampling6.1} parent=47 // pred_check
          %p1373 = pneg %p197
        $region78: #{aslp_conv1d_subsampling6.1} parent=47 // pred_check_branch
          %1375 = sbr.rel (%p1373) target = $region80
        $region79: #{aslp_conv1d_subsampling6.1} parent=47 // pred_region
          %s1377 = ssub.s32 64, 64
          %1378 = vsyncadd %s1369, %s1377
          %s1379 = smul.addr %s27, 64
          %s1380 = scalar_lea.hbm %s7, %s1379
          %s1382 = sshll.u32 %s1372, 4
          %s1383 = int_to_ptr.vmem [resolvable:$true] %s1382
          %1385 = dma.vmem_to_hbm [thread:$0]  %s1383, 64, %s1380, %s1369
        $region80: #{aslp_conv1d_subsampling6.1} parent=47 // pred_fallthru
          _
      $region48: #{aslp_conv1d_subsampling6.1} parent=5 // pred_fallthru
        _
      %p1386 = scmp.le.s32.totalorder 2, %s22
      // Predicated region
      $region81: #{aslp_conv1d_subsampling6.1} parent=5 // pred_check
        %p1387 = pneg %p1386
      $region82: #{aslp_conv1d_subsampling6.1} parent=5 // pred_check_branch
        %1389 = sbr.rel (%p1387) target = $region84
      $region83: #{aslp_conv1d_subsampling6.1} parent=5 // pred_region
        %s1390 = ssub.s32 %s22, 2
        // Predicated region
        $region85: #{aslp_conv1d_subsampling6.1} parent=83 // pred_check
          %p1391 = pneg %p203
        $region86: #{aslp_conv1d_subsampling6.1} parent=83 // pred_check_branch
          %1393 = sbr.rel (%p1391) target = $region88
        $region87: #{aslp_conv1d_subsampling6.1} parent=83 // pred_region
          %s1394 = sand.u32 %s188, 1
          %s1395 = scalar_lea.sflag [#allocation6], %s1394
          %s1396 = sand.u32 %s188, 1
          %s1397 = smul.addr %s1396, 4
          %s1398 = scalar_lea.vmem [#allocation16], %s1397
          %1399 = dma.done %s1395, 64
        $region88: #{aslp_conv1d_subsampling6.1} parent=83 // pred_fallthru
          _
      $region84: #{aslp_conv1d_subsampling6.1} parent=5 // pred_fallthru
        _
    $region6: #{aslp_conv1d_subsampling6.1} parent=1 // loop_footer
      %s26 = sadd.s32 1, %s22
    $region7: #{aslp_conv1d_subsampling6.1} parent=1 // loop_footer_branch
      %21 = sbr.rel target = $region3
    $region8: #{aslp_conv1d_subsampling6.1} parent=1 // loop_exit
      _
    %1400 = vsyncpa [#allocation5], 1
    %s1401 = scalar_lea.sflag [#allocation5], 1
    %1402 = vsyncpa %s1401, 1
    %1403 = vsyncpa [#allocation8], 1
    %1404 = vsyncpa [#allocation11], 1
    %1405 = vsyncpa [#allocation14], 1
    %1406 = vsyncpa [#allocation6], 1
    %s1407 = scalar_lea.sflag [#allocation6], 1
    %1408 = vsyncpa %s1407, 1

</llo_original>
